<compile_context>
chip_gen: v7x
topology: tpu7x:2x2x1
jax: 0.10.0
libtpu: 0.0.40
codegen_flags: <defaults>
</compile_context>

<pallas_src>
import functools

import jax
import jax.numpy as jnp
from jax.experimental import pallas as pl
from jax.experimental.pallas import tpu as pltpu

DROPOUT_KEEP_PROB = 0.5  # nn.Dropout(0.5)


def _round_up(x, m):
    return (x + m - 1) // m * m


# ------------------------------ Pallas kernel -------------------------------

def _mlp_kernel(seed_ref, x_ref,
                w1_ref, b1_ref, w2_ref, b2_ref, w3_ref, b3_ref, w4_ref, b4_ref,
                o_ref, *, training):
    """Fused 4-layer MLP on one row-tile of the batch.

    x_ref : (TM, D_in)       f32 input row-tile (cast to bf16 in-kernel)
    wN_ref: (D_{N-1}, D_N)   bf16 weights,  bN_ref: (1, D_N) f32 biases
    o_ref : (TM, D_out)      output row-tile (f32 or bf16)
    seed_ref: (1,) int32 in SMEM (only read when training=True)
    """
    if training:
        # Per-call, per-tile PRNG stream: salting with num_programs keeps
        # consecutive seeds from aliasing tile streams across calls.
        pltpu.prng_seed(seed_ref[0] * pl.num_programs(0) + pl.program_id(0))

    def layer(h_bf16, w_ref, b_ref, *, relu, dropout):
        y = jnp.dot(h_bf16, w_ref[...], preferred_element_type=jnp.float32)
        y = y + b_ref[...]
        if relu:
            y = jnp.maximum(y, 0.0)
        if dropout and training:
            # Threshold only valid for keep_prob strictly inside (0, 1).
            assert 0.0 < DROPOUT_KEEP_PROB < 1.0
            thresh = jnp.uint32(int(round(DROPOUT_KEEP_PROB * 4294967296.0)))
            bits = pltpu.bitcast(pltpu.prng_random_bits(y.shape), jnp.uint32)
            y = jnp.where(bits < thresh, y * (1.0 / DROPOUT_KEEP_PROB), 0.0)
        return y

    # f32 -> bf16 cast on the VPU, hidden under the layer-1 MXU work.
    h = layer(x_ref[...].astype(jnp.bfloat16), w1_ref, b1_ref,
              relu=True, dropout=True)
    h = layer(h.astype(jnp.bfloat16), w2_ref, b2_ref, relu=True, dropout=True)
    h = layer(h.astype(jnp.bfloat16), w3_ref, b3_ref, relu=True, dropout=True)
    y = layer(h.astype(jnp.bfloat16), w4_ref, b4_ref, relu=False, dropout=False)
    o_ref[...] = y.astype(o_ref.dtype)


# ------------------------------ JAX wrapper ----------------------------------

def prepare_params(params):
    """One-time bf16 cast of weights (biases stay f32, shaped (1, dout))."""
    prepared = {}
    for n in range(1, 5):
        prepared[f"w{n}"] = params[f"w{n}"].astype(jnp.bfloat16)
        prepared[f"b{n}"] = params[f"b{n}"].astype(jnp.float32).reshape(1, -1)
    return prepared


def _choose_row_tile(m, row_tile):
    """Row tile: sublane-aligned, capped at `row_tile`, and split into >=2
    tiles whenever the batch is big enough so both v7x TensorCores get work."""
    tm_full = _round_up(m, 8)
    tm = min(row_tile, tm_full)
    if tm == tm_full and tm_full >= 32:
        tm = _round_up(-(-tm_full // 2), 16)  # ceil(m/2), rounded to 16 rows
    return tm


def prompt_generator_mlp(prepared, x, *, training=False, seed=0,
                         row_tile=512, out_dtype=jnp.float32):
    """x: (batch, input_size) f32 -> (batch, output_size) `out_dtype`."""
    m, d_in = x.shape
    d_out = prepared["w4"].shape[1]

    tm = _choose_row_tile(m, row_tile)
    m_pad = _round_up(m, tm)
    x_p = jnp.pad(x.astype(jnp.float32), ((0, m_pad - m), (0, 0)))

    ws = [prepared[f"w{n}"] for n in range(1, 5)]
    bs = [prepared[f"b{n}"] for n in range(1, 5)]
    seed_arr = jnp.asarray([seed], dtype=jnp.int32)

    dims = [d_in] + [w.shape[1] for w in ws]
    flops = 2 * m_pad * sum(a * b for a, b in zip(dims[:-1], dims[1:]))
    bytes_accessed = (x_p.size * 4 + sum(w.size * 2 for w in ws)
                      + sum(b.size * 4 for b in bs)
                      + m_pad * d_out * jnp.dtype(out_dtype).itemsize)

    def _full(arr):  # grid-invariant weight / bias: whole array every step
        return pl.BlockSpec(arr.shape, lambda i: (0, 0))

    in_specs = [pl.BlockSpec(memory_space=pltpu.MemorySpace.SMEM),  # seed
                pl.BlockSpec((tm, d_in), lambda i: (i, 0))]         # x row-tile
    operands = [seed_arr, x_p]
    for w, b in zip(ws, bs):
        in_specs += [_full(w), _full(b)]
        operands += [w, b]

    out = pl.pallas_call(
        functools.partial(_mlp_kernel, training=training),
        out_shape=jax.ShapeDtypeStruct((m_pad, d_out), out_dtype),
        grid=(m_pad // tm,),
        in_specs=in_specs,
        out_specs=pl.BlockSpec((tm, d_out), lambda i: (i, 0)),
        compiler_params=pltpu.CompilerParams(
            dimension_semantics=("parallel",)),
        cost_estimate=pl.CostEstimate(flops=flops, transcendentals=0,
                                      bytes_accessed=int(bytes_accessed)),
    )(*operands)
    return out[:m]


# ------------------------------ parameters -----------------------------------

def init_params(key, input_size=512, output_size=768):
    """Matches nn.Linear default init: U(-1/sqrt(fan_in), 1/sqrt(fan_in)).

    Weights stored as (in, out) (transposed vs. torch's (out, in))."""
    dims = [input_size, 512, 256, 128, output_size]
    params = {}
    keys = jax.random.split(key, 2 * (len(dims) - 1))
    for n, (din, dout) in enumerate(zip(dims[:-1], dims[1:]), start=1):
        bound = 1.0 / (din ** 0.5)
        params[f"w{n}"] = jax.random.uniform(
            keys[2 * n - 2], (din, dout), jnp.float32, -bound, bound)
        params[f"b{n}"] = jax.random.uniform(
            keys[2 * n - 1], (1, dout), jnp.float32, -bound, bound)
    return params


def mlp_reference(params, x):
    """Plain-JAX eval-mode reference (dropout = identity)."""
    h = jnp.maximum(x @ params["w1"] + params["b1"], 0.0)
    h = jnp.maximum(h @ params["w2"] + params["b2"], 0.0)
    h = jnp.maximum(h @ params["w3"] + params["b3"], 0.0)
    return h @ params["w4"] + params["b4"]


# ---------------------------------- main --------------------------------------

if __name__ == "__main__":
    key = jax.random.PRNGKey(0)
    kp, kx1, kx2 = jax.random.split(key, 3)

    input_size, output_size = 512, 768
    params = init_params(kp, input_size, output_size)
    prepared = prepare_params(params)          # one-time bf16 weight cast

    fwd = jax.jit(functools.partial(prompt_generator_mlp, prepared))

    # Tiny batch (single grid step, matches the torch module's typical use).
    x_small = jax.random.normal(kx1, (8, input_size), jnp.float32)
    out_small = jax.block_until_ready(fwd(x_small))
    assert out_small.shape == (8, output_size), out_small.shape
    err = float(jnp.max(jnp.abs(out_small - mlp_reference(params, x_small))))
    assert err < 0.25, f"small-batch max |err| = {err}"   # bf16 MXU vs f32 ref

    # Larger batch: exercises row padding + >=2 "parallel" grid steps.
    x_big = jax.random.normal(kx2, (200, input_size), jnp.float32)
    out_big = jax.block_until_ready(fwd(x_big))
    assert out_big.shape == (200, output_size), out_big.shape
    err = float(jnp.max(jnp.abs(out_big - mlp_reference(params, x_big))))
    assert err < 0.25, f"multi-tile max |err| = {err}"

    print("KERNEL_OK")
</pallas_src>

<mosaic_0001>
module attributes {stable_mosaic.version = 11 : i64} {
  func.func @_mlp_kernel(%arg0: i32, %arg1: memref<1xi32, #tpu.memory_space<smem>>, %arg2: memref<8x512xf32, #tpu.memory_space<vmem>>, %arg3: memref<512x512xbf16, #tpu.memory_space<vmem>>, %arg4: memref<1x512xf32, #tpu.memory_space<vmem>>, %arg5: memref<512x256xbf16, #tpu.memory_space<vmem>>, %arg6: memref<1x256xf32, #tpu.memory_space<vmem>>, %arg7: memref<256x128xbf16, #tpu.memory_space<vmem>>, %arg8: memref<1x128xf32, #tpu.memory_space<vmem>>, %arg9: memref<128x768xbf16, #tpu.memory_space<vmem>>, %arg10: memref<1x768xf32, #tpu.memory_space<vmem>>, %arg11: memref<8x768xf32, #tpu.memory_space<vmem>>) attributes {dimension_semantics = [#tpu.dimension_semantics<parallel>], iteration_bounds = array<i64: 1>, scalar_prefetch = 0 : i64, scratch_operands = 0 : i64, tpu.core_type = #tpu.core_type<tc>, window_params = [{transform_indices = @transform_0, window_bounds = array<i64: 1>}, {transform_indices = @transform_1, window_bounds = array<i64: 8, 512>}, {pipeline_mode = #tpu.pipeline_mode<synchronous>, transform_indices = @transform_2, window_bounds = array<i64: 512, 512>}, {pipeline_mode = #tpu.pipeline_mode<synchronous>, transform_indices = @transform_3, window_bounds = array<i64: 1, 512>}, {pipeline_mode = #tpu.pipeline_mode<synchronous>, transform_indices = @transform_4, window_bounds = array<i64: 512, 256>}, {pipeline_mode = #tpu.pipeline_mode<synchronous>, transform_indices = @transform_5, window_bounds = array<i64: 1, 256>}, {pipeline_mode = #tpu.pipeline_mode<synchronous>, transform_indices = @transform_6, window_bounds = array<i64: 256, 128>}, {pipeline_mode = #tpu.pipeline_mode<synchronous>, transform_indices = @transform_7, window_bounds = array<i64: 1, 128>}, {pipeline_mode = #tpu.pipeline_mode<synchronous>, transform_indices = @transform_8, window_bounds = array<i64: 128, 768>}, {pipeline_mode = #tpu.pipeline_mode<synchronous>, transform_indices = @transform_9, window_bounds = array<i64: 1, 768>}, {transform_indices = @transform_10, window_bounds = array<i64: 8, 768>}]} {
    %c0 = arith.constant 0 : index
    %c0_0 = arith.constant 0 : index
    %0 = vector.load %arg2[%c0, %c0_0] : memref<8x512xf32, #tpu.memory_space<vmem>>, vector<8x512xf32>
    %1 = arith.truncf %0 : vector<8x512xf32> to vector<8x512xbf16>
    %c0_1 = arith.constant 0 : index
    %c0_2 = arith.constant 0 : index
    %2 = vector.load %arg3[%c0_1, %c0_2] : memref<512x512xbf16, #tpu.memory_space<vmem>>, vector<512x512xbf16>
    %cst = arith.constant dense<0.000000e+00> : vector<8x512xf32>
    %3 = tpu.matmul %1, %2, %cst {dimension_numbers = #tpu.dot_dimension_numbers<[1], [0], [0], [1], [0, 0, 1, 1], [], []>} : vector<8x512xbf16>, vector<512x512xbf16>, vector<8x512xf32> -> vector<8x512xf32>
    %c0_3 = arith.constant 0 : index
    %c0_4 = arith.constant 0 : index
    %4 = vector.load %arg4[%c0_3, %c0_4] : memref<1x512xf32, #tpu.memory_space<vmem>>, vector<1x512xf32>
    %5 = vector.broadcast %4 : vector<1x512xf32> to vector<8x512xf32>
    %6 = arith.addf %3, %5 : vector<8x512xf32>
    %cst_5 = arith.constant 0.000000e+00 : f32
    %7 = vector.broadcast %cst_5 : f32 to vector<8x512xf32>
    %8 = arith.maximumf %6, %7 : vector<8x512xf32>
    %9 = arith.truncf %8 : vector<8x512xf32> to vector<8x512xbf16>
    %c0_6 = arith.constant 0 : index
    %c0_7 = arith.constant 0 : index
    %10 = vector.load %arg5[%c0_6, %c0_7] : memref<512x256xbf16, #tpu.memory_space<vmem>>, vector<512x256xbf16>
    %cst_8 = arith.constant dense<0.000000e+00> : vector<8x256xf32>
    %11 = tpu.matmul %9, %10, %cst_8 {dimension_numbers = #tpu.dot_dimension_numbers<[1], [0], [0], [1], [0, 0, 1, 1], [], []>} : vector<8x512xbf16>, vector<512x256xbf16>, vector<8x256xf32> -> vector<8x256xf32>
    %c0_9 = arith.constant 0 : index
    %c0_10 = arith.constant 0 : index
    %12 = vector.load %arg6[%c0_9, %c0_10] : memref<1x256xf32, #tpu.memory_space<vmem>>, vector<1x256xf32>
    %13 = vector.broadcast %12 : vector<1x256xf32> to vector<8x256xf32>
    %14 = arith.addf %11, %13 : vector<8x256xf32>
    %cst_11 = arith.constant 0.000000e+00 : f32
    %15 = vector.broadcast %cst_11 : f32 to vector<8x256xf32>
    %16 = arith.maximumf %14, %15 : vector<8x256xf32>
    %17 = arith.truncf %16 : vector<8x256xf32> to vector<8x256xbf16>
    %c0_12 = arith.constant 0 : index
    %c0_13 = arith.constant 0 : index
    %18 = vector.load %arg7[%c0_12, %c0_13] : memref<256x128xbf16, #tpu.memory_space<vmem>>, vector<256x128xbf16>
    %cst_14 = arith.constant dense<0.000000e+00> : vector<8x128xf32>
    %19 = tpu.matmul %17, %18, %cst_14 {dimension_numbers = #tpu.dot_dimension_numbers<[1], [0], [0], [1], [0, 0, 1, 1], [], []>} : vector<8x256xbf16>, vector<256x128xbf16>, vector<8x128xf32> -> vector<8x128xf32>
    %c0_15 = arith.constant 0 : index
    %c0_16 = arith.constant 0 : index
    %20 = vector.load %arg8[%c0_15, %c0_16] : memref<1x128xf32, #tpu.memory_space<vmem>>, vector<1x128xf32>
    %21 = vector.broadcast %20 : vector<1x128xf32> to vector<8x128xf32>
    %22 = arith.addf %19, %21 : vector<8x128xf32>
    %cst_17 = arith.constant 0.000000e+00 : f32
    %23 = vector.broadcast %cst_17 : f32 to vector<8x128xf32>
    %24 = arith.maximumf %22, %23 : vector<8x128xf32>
    %25 = arith.truncf %24 : vector<8x128xf32> to vector<8x128xbf16>
    %c0_18 = arith.constant 0 : index
    %c0_19 = arith.constant 0 : index
    %26 = vector.load %arg9[%c0_18, %c0_19] : memref<128x768xbf16, #tpu.memory_space<vmem>>, vector<128x768xbf16>
    %cst_20 = arith.constant dense<0.000000e+00> : vector<8x768xf32>
    %27 = tpu.matmul %25, %26, %cst_20 {dimension_numbers = #tpu.dot_dimension_numbers<[1], [0], [0], [1], [0, 0, 1, 1], [], []>} : vector<8x128xbf16>, vector<128x768xbf16>, vector<8x768xf32> -> vector<8x768xf32>
    %c0_21 = arith.constant 0 : index
    %c0_22 = arith.constant 0 : index
    %28 = vector.load %arg10[%c0_21, %c0_22] : memref<1x768xf32, #tpu.memory_space<vmem>>, vector<1x768xf32>
    %29 = vector.broadcast %28 : vector<1x768xf32> to vector<8x768xf32>
    %30 = arith.addf %27, %29 : vector<8x768xf32>
    %c0_23 = arith.constant 0 : index
    %c0_24 = arith.constant 0 : index
    %31 = vector.load %arg11[%c0_23, %c0_24] : memref<8x768xf32, #tpu.memory_space<vmem>>, vector<8x768xf32>
    tpu.vector_store %arg11[%c0_23, %c0_24], %30 {strides = array<i32>} : memref<8x768xf32, #tpu.memory_space<vmem>>, vector<8x768xf32>,
    return
  }
  func.func @transform_0(%arg0: i32) -> i32 {
    %c0_i32 = arith.constant 0 : i32
    %c0_i32_0 = arith.constant 0 : i32
    return %c0_i32 : i32
  }
  func.func @transform_1(%arg0: i32) -> (i32, i32) {
    %c0_i32 = arith.constant 0 : i32
    %c0_i32_0 = arith.constant 0 : i32
    return %arg0, %c0_i32 : i32, i32
  }
  func.func @transform_2(%arg0: i32) -> (i32, i32) {
    %c0_i32 = arith.constant 0 : i32
    %c0_i32_0 = arith.constant 0 : i32
    %c0_i32_1 = arith.constant 0 : i32
    return %c0_i32, %c0_i32_0 : i32, i32
  }
  func.func @transform_3(%arg0: i32) -> (i32, i32) {
    %c0_i32 = arith.constant 0 : i32
    %c0_i32_0 = arith.constant 0 : i32
    %c0_i32_1 = arith.constant 0 : i32
    return %c0_i32, %c0_i32_0 : i32, i32
  }
  func.func @transform_4(%arg0: i32) -> (i32, i32) {
    %c0_i32 = arith.constant 0 : i32
    %c0_i32_0 = arith.constant 0 : i32
    %c0_i32_1 = arith.constant 0 : i32
    return %c0_i32, %c0_i32_0 : i32, i32
  }
  func.func @transform_5(%arg0: i32) -> (i32, i32) {
    %c0_i32 = arith.constant 0 : i32
    %c0_i32_0 = arith.constant 0 : i32
    %c0_i32_1 = arith.constant 0 : i32
    return %c0_i32, %c0_i32_0 : i32, i32
  }
  func.func @transform_6(%arg0: i32) -> (i32, i32) {
    %c0_i32 = arith.constant 0 : i32
    %c0_i32_0 = arith.constant 0 : i32
    %c0_i32_1 = arith.constant 0 : i32
    return %c0_i32, %c0_i32_0 : i32, i32
  }
  func.func @transform_7(%arg0: i32) -> (i32, i32) {
    %c0_i32 = arith.constant 0 : i32
    %c0_i32_0 = arith.constant 0 : i32
    %c0_i32_1 = arith.constant 0 : i32
    return %c0_i32, %c0_i32_0 : i32, i32
  }
  func.func @transform_8(%arg0: i32) -> (i32, i32) {
    %c0_i32 = arith.constant 0 : i32
    %c0_i32_0 = arith.constant 0 : i32
    %c0_i32_1 = arith.constant 0 : i32
    return %c0_i32, %c0_i32_0 : i32, i32
  }
  func.func @transform_9(%arg0: i32) -> (i32, i32) {
    %c0_i32 = arith.constant 0 : i32
    %c0_i32_0 = arith.constant 0 : i32
    %c0_i32_1 = arith.constant 0 : i32
    return %c0_i32, %c0_i32_0 : i32, i32
  }
  func.func @transform_10(%arg0: i32) -> (i32, i32) {
    %c0_i32 = arith.constant 0 : i32
    %c0_i32_0 = arith.constant 0 : i32
    return %arg0, %c0_i32 : i32, i32
  }
}

</mosaic_0001>

<llo_original>
// kernel: prompt_generator_mlp.1
$region0: #{prompt_generator_mlp.1}
  #allocation0 [shape = 'u32[]', space=smem, size = 0x4, offset = 0x4, fixed_abs, tag = 'smem constant byte address 0x4 - core index']
  #allocation1 [shape = 'u32[144,128]{1,0:T(1,128)}', space=vmem, size = 0x12000, scoped, tag = 'internal scratch']
  #allocation2 [shape = 's32[1]{0:T(128)S(6)}', space=smem, size = 0x200, scoped, tag = 'scoped memory for prompt_generator_mlp.1']
  %s0 = inlined_call_operand.<no memory space> [shape: s32[1], index: 0, kind: input, shape index: {}]
  %s1 = inlined_call_operand.vmem [shape: f32[8,512], index: 1, kind: input, shape index: {}]
  %s2 = inlined_call_operand.vmem [shape: bf16[512,512], index: 2, kind: input, shape index: {}]
  %s3 = inlined_call_operand.vmem [shape: f32[1,512], index: 3, kind: input, shape index: {}]
  %s4 = inlined_call_operand.vmem [shape: bf16[512,256], index: 4, kind: input, shape index: {}]
  %s5 = inlined_call_operand.vmem [shape: f32[1,256], index: 5, kind: input, shape index: {}]
  %s6 = inlined_call_operand.vmem [shape: bf16[256,128], index: 6, kind: input, shape index: {}]
  %s7 = inlined_call_operand.vmem [shape: f32[1,128], index: 7, kind: input, shape index: {}]
  %s8 = inlined_call_operand.vmem [shape: bf16[128,768], index: 8, kind: input, shape index: {}]
  %s9 = inlined_call_operand.vmem [shape: f32[1,768], index: 9, kind: input, shape index: {}]
  %s10 = inlined_call_operand.hbm [shape: f32[8,768], index: 10, kind: output, shape index: {}]
  %s11 = sld [smem:[#allocation0]]
  $region50: #{prompt_generator_mlp.1} parent=0
    _
  %s13 = ssub.s32 1, %s11
  %s14 = scalar_select 0, %s13, %s11
  %15 = sst [smem:[#allocation2]] %s0
  $region1: #{prompt_generator_mlp.1} parent=0
    #allocation3 [shape = 'u8[24576]{0}', space=vmem, size = 0x6000, scoped, tag = 'output window, operand 0, single buffered']
    #allocation4 [shape = 's32[1]{0}', space=sflag, size = 0x4, scoped, tag = 'scoped memory for prompt_generator_mlp.1']
    %16 = vsyncpa [#allocation4], 0
    // Predicated region
    $region2: #{prompt_generator_mlp.1} parent=1 // pred_check
      _
    $region3: #{prompt_generator_mlp.1} parent=1 // pred_check_branch
      %18 = sbr.rel (0) target = $region5
    $region4: #{prompt_generator_mlp.1} parent=1 // pred_region
      _
    $region5: #{prompt_generator_mlp.1} parent=1 // pred_fallthru
      _
    // Predicated region
    $region6: #{prompt_generator_mlp.1} parent=1 // pred_check
      _
    $region7: #{prompt_generator_mlp.1} parent=1 // pred_check_branch
      %20 = sbr.rel (0) target = $region9
    $region8: #{prompt_generator_mlp.1} parent=1 // pred_region
      _
    $region9: #{prompt_generator_mlp.1} parent=1 // pred_fallthru
      _
    // Predicated region
    $region10: #{prompt_generator_mlp.1} parent=1 // pred_check
      _
    $region11: #{prompt_generator_mlp.1} parent=1 // pred_check_branch
      %22 = sbr.rel (0) target = $region13
    $region12: #{prompt_generator_mlp.1} parent=1 // pred_region
      _
    $region13: #{prompt_generator_mlp.1} parent=1 // pred_fallthru
      _
    // Predicated region
    $region14: #{prompt_generator_mlp.1} parent=1 // pred_check
      _
    $region15: #{prompt_generator_mlp.1} parent=1 // pred_check_branch
      %24 = sbr.rel (0) target = $region17
    $region16: #{prompt_generator_mlp.1} parent=1 // pred_region
      _
    $region17: #{prompt_generator_mlp.1} parent=1 // pred_fallthru
      _
    // Predicated region
    $region18: #{prompt_generator_mlp.1} parent=1 // pred_check
      _
    $region19: #{prompt_generator_mlp.1} parent=1 // pred_check_branch
      %26 = sbr.rel (0) target = $region21
    $region20: #{prompt_generator_mlp.1} parent=1 // pred_region
      _
    $region21: #{prompt_generator_mlp.1} parent=1 // pred_fallthru
      _
    // Predicated region
    $region22: #{prompt_generator_mlp.1} parent=1 // pred_check
      _
    $region23: #{prompt_generator_mlp.1} parent=1 // pred_check_branch
      %28 = sbr.rel (0) target = $region25
    $region24: #{prompt_generator_mlp.1} parent=1 // pred_region
      _
    $region25: #{prompt_generator_mlp.1} parent=1 // pred_fallthru
      _
    // Predicated region
    $region26: #{prompt_generator_mlp.1} parent=1 // pred_check
      _
    $region27: #{prompt_generator_mlp.1} parent=1 // pred_check_branch
      %30 = sbr.rel (0) target = $region29
    $region28: #{prompt_generator_mlp.1} parent=1 // pred_region
      _
    $region29: #{prompt_generator_mlp.1} parent=1 // pred_fallthru
      _
    // Predicated region
    $region30: #{prompt_generator_mlp.1} parent=1 // pred_check
      _
    $region31: #{prompt_generator_mlp.1} parent=1 // pred_check_branch
      %32 = sbr.rel (0) target = $region33
    $region32: #{prompt_generator_mlp.1} parent=1 // pred_region
      _
    $region33: #{prompt_generator_mlp.1} parent=1 // pred_fallthru
      _
    // Predicated region
    $region34: #{prompt_generator_mlp.1} parent=1 // pred_check
      _
    $region35: #{prompt_generator_mlp.1} parent=1 // pred_check_branch
      %34 = sbr.rel (0) target = $region37
    $region36: #{prompt_generator_mlp.1} parent=1 // pred_region
      _
    $region37: #{prompt_generator_mlp.1} parent=1 // pred_fallthru
      _
    // Predicated region
    $region38: #{prompt_generator_mlp.1} parent=1 // pred_check
      _
    $region39: #{prompt_generator_mlp.1} parent=1 // pred_check_branch
      %36 = sbr.rel (0) target = $region41
    $region40: #{prompt_generator_mlp.1} parent=1 // pred_region
      _
    $region41: #{prompt_generator_mlp.1} parent=1 // pred_fallthru
      _
    %v38 = vld [vmem:[%s1] sm:$0xff]
    %v39 = vld [vmem:[%s1 + $0x8] sm:$0xff]
    %v40 = vld [vmem:[%s1 + $0x10] sm:$0xff]
    %v41 = vld [vmem:[%s1 + $0x18] sm:$0xff]
    %v42 = vpack.c.bf16 %v38, %v38
    %v43 = vpack.c.bf16 %v39, %v39
    %v44 = vpack.c.bf16 %v40, %v40
    %v45 = vpack.c.bf16 %v41, %v41
    %v46 = vld [vmem:[%s2] sm:$0xff]
    %v47 = vld [vmem:[%s2 + $0x8] sm:$0xff]
    %v48 = vld [vmem:[%s2 + $0x10] sm:$0xff]
    %v49 = vld [vmem:[%s2 + $0x18] sm:$0xff]
    %v50 = vld [vmem:[%s2 + $0x20] sm:$0xff]
    %v51 = vld [vmem:[%s2 + $0x28] sm:$0xff]
    %v52 = vld [vmem:[%s2 + $0x30] sm:$0xff]
    %v53 = vld [vmem:[%s2 + $0x38] sm:$0xff]
    %v54 = vld [vmem:[%s2 + $0x40] sm:$0xff]
    %v55 = vld [vmem:[%s2 + $0x48] sm:$0xff]
    %v56 = vld [vmem:[%s2 + $0x50] sm:$0xff]
    %v57 = vld [vmem:[%s2 + $0x58] sm:$0xff]
    %v58 = vld [vmem:[%s2 + $0x60] sm:$0xff]
    %v59 = vld [vmem:[%s2 + $0x68] sm:$0xff]
    %v60 = vld [vmem:[%s2 + $0x70] sm:$0xff]
    %v61 = vld [vmem:[%s2 + $0x78] sm:$0xff]
    %v62 = vld [vmem:[%s2 + $0x80] sm:$0xff]
    %v63 = vld [vmem:[%s2 + $0x88] sm:$0xff]
    %v64 = vld [vmem:[%s2 + $0x90] sm:$0xff]
    %v65 = vld [vmem:[%s2 + $0x98] sm:$0xff]
    %v66 = vld [vmem:[%s2 + $0xa0] sm:$0xff]
    %v67 = vld [vmem:[%s2 + $0xa8] sm:$0xff]
    %v68 = vld [vmem:[%s2 + $0xb0] sm:$0xff]
    %v69 = vld [vmem:[%s2 + $0xb8] sm:$0xff]
    %v70 = vld [vmem:[%s2 + $0xc0] sm:$0xff]
    %v71 = vld [vmem:[%s2 + $0xc8] sm:$0xff]
    %v72 = vld [vmem:[%s2 + $0xd0] sm:$0xff]
    %v73 = vld [vmem:[%s2 + $0xd8] sm:$0xff]
    %v74 = vld [vmem:[%s2 + $0xe0] sm:$0xff]
    %v75 = vld [vmem:[%s2 + $0xe8] sm:$0xff]
    %v76 = vld [vmem:[%s2 + $0xf0] sm:$0xff]
    %v77 = vld [vmem:[%s2 + $0xf8] sm:$0xff]
    %v78 = vld [vmem:[%s2 + $0x100] sm:$0xff]
    %v79 = vld [vmem:[%s2 + $0x108] sm:$0xff]
    %v80 = vld [vmem:[%s2 + $0x110] sm:$0xff]
    %v81 = vld [vmem:[%s2 + $0x118] sm:$0xff]
    %v82 = vld [vmem:[%s2 + $0x120] sm:$0xff]
    %v83 = vld [vmem:[%s2 + $0x128] sm:$0xff]
    %v84 = vld [vmem:[%s2 + $0x130] sm:$0xff]
    %v85 = vld [vmem:[%s2 + $0x138] sm:$0xff]
    %v86 = vld [vmem:[%s2 + $0x140] sm:$0xff]
    %v87 = vld [vmem:[%s2 + $0x148] sm:$0xff]
    %v88 = vld [vmem:[%s2 + $0x150] sm:$0xff]
    %v89 = vld [vmem:[%s2 + $0x158] sm:$0xff]
    %v90 = vld [vmem:[%s2 + $0x160] sm:$0xff]
    %v91 = vld [vmem:[%s2 + $0x168] sm:$0xff]
    %v92 = vld [vmem:[%s2 + $0x170] sm:$0xff]
    %v93 = vld [vmem:[%s2 + $0x178] sm:$0xff]
    %v94 = vld [vmem:[%s2 + $0x180] sm:$0xff]
    %v95 = vld [vmem:[%s2 + $0x188] sm:$0xff]
    %v96 = vld [vmem:[%s2 + $0x190] sm:$0xff]
    %v97 = vld [vmem:[%s2 + $0x198] sm:$0xff]
    %v98 = vld [vmem:[%s2 + $0x1a0] sm:$0xff]
    %v99 = vld [vmem:[%s2 + $0x1a8] sm:$0xff]
    %v100 = vld [vmem:[%s2 + $0x1b0] sm:$0xff]
    %v101 = vld [vmem:[%s2 + $0x1b8] sm:$0xff]
    %v102 = vld [vmem:[%s2 + $0x1c0] sm:$0xff]
    %v103 = vld [vmem:[%s2 + $0x1c8] sm:$0xff]
    %v104 = vld [vmem:[%s2 + $0x1d0] sm:$0xff]
    %v105 = vld [vmem:[%s2 + $0x1d8] sm:$0xff]
    %v106 = vld [vmem:[%s2 + $0x1e0] sm:$0xff]
    %v107 = vld [vmem:[%s2 + $0x1e8] sm:$0xff]
    %v108 = vld [vmem:[%s2 + $0x1f0] sm:$0xff]
    %v109 = vld [vmem:[%s2 + $0x1f8] sm:$0xff]
    %v110 = vld [vmem:[%s2 + $0x200] sm:$0xff]
    %v111 = vld [vmem:[%s2 + $0x208] sm:$0xff]
    %v112 = vld [vmem:[%s2 + $0x210] sm:$0xff]
    %v113 = vld [vmem:[%s2 + $0x218] sm:$0xff]
    %v114 = vld [vmem:[%s2 + $0x220] sm:$0xff]
    %v115 = vld [vmem:[%s2 + $0x228] sm:$0xff]
    %v116 = vld [vmem:[%s2 + $0x230] sm:$0xff]
    %v117 = vld [vmem:[%s2 + $0x238] sm:$0xff]
    %v118 = vld [vmem:[%s2 + $0x240] sm:$0xff]
    %v119 = vld [vmem:[%s2 + $0x248] sm:$0xff]
    %v120 = vld [vmem:[%s2 + $0x250] sm:$0xff]
    %v121 = vld [vmem:[%s2 + $0x258] sm:$0xff]
    %v122 = vld [vmem:[%s2 + $0x260] sm:$0xff]
    %v123 = vld [vmem:[%s2 + $0x268] sm:$0xff]
    %v124 = vld [vmem:[%s2 + $0x270] sm:$0xff]
    %v125 = vld [vmem:[%s2 + $0x278] sm:$0xff]
    %v126 = vld [vmem:[%s2 + $0x280] sm:$0xff]
    %v127 = vld [vmem:[%s2 + $0x288] sm:$0xff]
    %v128 = vld [vmem:[%s2 + $0x290] sm:$0xff]
    %v129 = vld [vmem:[%s2 + $0x298] sm:$0xff]
    %v130 = vld [vmem:[%s2 + $0x2a0] sm:$0xff]
    %v131 = vld [vmem:[%s2 + $0x2a8] sm:$0xff]
    %v132 = vld [vmem:[%s2 + $0x2b0] sm:$0xff]
    %v133 = vld [vmem:[%s2 + $0x2b8] sm:$0xff]
    %v134 = vld [vmem:[%s2 + $0x2c0] sm:$0xff]
    %v135 = vld [vmem:[%s2 + $0x2c8] sm:$0xff]
    %v136 = vld [vmem:[%s2 + $0x2d0] sm:$0xff]
    %v137 = vld [vmem:[%s2 + $0x2d8] sm:$0xff]
    %v138 = vld [vmem:[%s2 + $0x2e0] sm:$0xff]
    %v139 = vld [vmem:[%s2 + $0x2e8] sm:$0xff]
    %v140 = vld [vmem:[%s2 + $0x2f0] sm:$0xff]
    %v141 = vld [vmem:[%s2 + $0x2f8] sm:$0xff]
    %v142 = vld [vmem:[%s2 + $0x300] sm:$0xff]
    %v143 = vld [vmem:[%s2 + $0x308] sm:$0xff]
    %v144 = vld [vmem:[%s2 + $0x310] sm:$0xff]
    %v145 = vld [vmem:[%s2 + $0x318] sm:$0xff]
    %v146 = vld [vmem:[%s2 + $0x320] sm:$0xff]
    %v147 = vld [vmem:[%s2 + $0x328] sm:$0xff]
    %v148 = vld [vmem:[%s2 + $0x330] sm:$0xff]
    %v149 = vld [vmem:[%s2 + $0x338] sm:$0xff]
    %v150 = vld [vmem:[%s2 + $0x340] sm:$0xff]
    %v151 = vld [vmem:[%s2 + $0x348] sm:$0xff]
    %v152 = vld [vmem:[%s2 + $0x350] sm:$0xff]
    %v153 = vld [vmem:[%s2 + $0x358] sm:$0xff]
    %v154 = vld [vmem:[%s2 + $0x360] sm:$0xff]
    %v155 = vld [vmem:[%s2 + $0x368] sm:$0xff]
    %v156 = vld [vmem:[%s2 + $0x370] sm:$0xff]
    %v157 = vld [vmem:[%s2 + $0x378] sm:$0xff]
    %v158 = vld [vmem:[%s2 + $0x380] sm:$0xff]
    %v159 = vld [vmem:[%s2 + $0x388] sm:$0xff]
    %v160 = vld [vmem:[%s2 + $0x390] sm:$0xff]
    %v161 = vld [vmem:[%s2 + $0x398] sm:$0xff]
    %v162 = vld [vmem:[%s2 + $0x3a0] sm:$0xff]
    %v163 = vld [vmem:[%s2 + $0x3a8] sm:$0xff]
    %v164 = vld [vmem:[%s2 + $0x3b0] sm:$0xff]
    %v165 = vld [vmem:[%s2 + $0x3b8] sm:$0xff]
    %v166 = vld [vmem:[%s2 + $0x3c0] sm:$0xff]
    %v167 = vld [vmem:[%s2 + $0x3c8] sm:$0xff]
    %v168 = vld [vmem:[%s2 + $0x3d0] sm:$0xff]
    %v169 = vld [vmem:[%s2 + $0x3d8] sm:$0xff]
    %v170 = vld [vmem:[%s2 + $0x3e0] sm:$0xff]
    %v171 = vld [vmem:[%s2 + $0x3e8] sm:$0xff]
    %v172 = vld [vmem:[%s2 + $0x3f0] sm:$0xff]
    %v173 = vld [vmem:[%s2 + $0x3f8] sm:$0xff]
    %v174 = vld [vmem:[%s3] sm:$0xf]
    %v176 = vlaneseq
    %v177 = vshrl.u32 %v176, 7
    %v178 = vsub.s32 0, %v177
    %v179 = vrot.slane %v174, %v178
    %v180 = vlaneseq
    %v181 = vshrl.u32 %v180, 7
    %v182 = vsub.s32 1, %v181
    %v183 = vrot.slane %v174, %v182
    %v184 = vlaneseq
    %v185 = vshrl.u32 %v184, 7
    %v186 = vsub.s32 2, %v185
    %v187 = vrot.slane %v174, %v186
    %v188 = vlaneseq
    %v189 = vshrl.u32 %v188, 7
    %v190 = vsub.s32 3, %v189
    %v191 = vrot.slane %v174, %v190
    %v324 = vunpack.c.l.b16 %v46
    %v325 = vunpack.c.h.b16 %v46
    %v326 = vunpack.c.l.b16 %v47
    %v327 = vunpack.c.h.b16 %v47
    %v328 = vunpack.c.l.b16 %v48
    %v329 = vunpack.c.h.b16 %v48
    %v330 = vunpack.c.l.b16 %v49
    %v331 = vunpack.c.h.b16 %v49
    %v332 = vunpack.c.l.b16 %v50
    %v333 = vunpack.c.h.b16 %v50
    %v334 = vunpack.c.l.b16 %v51
    %v335 = vunpack.c.h.b16 %v51
    %v336 = vunpack.c.l.b16 %v52
    %v337 = vunpack.c.h.b16 %v52
    %v338 = vunpack.c.l.b16 %v53
    %v339 = vunpack.c.h.b16 %v53
    %v340 = vunpack.c.l.b16 %v54
    %v341 = vunpack.c.h.b16 %v54
    %v342 = vunpack.c.l.b16 %v55
    %v343 = vunpack.c.h.b16 %v55
    %v344 = vunpack.c.l.b16 %v56
    %v345 = vunpack.c.h.b16 %v56
    %v346 = vunpack.c.l.b16 %v57
    %v347 = vunpack.c.h.b16 %v57
    %v348 = vunpack.c.l.b16 %v58
    %v349 = vunpack.c.h.b16 %v58
    %v350 = vunpack.c.l.b16 %v59
    %v351 = vunpack.c.h.b16 %v59
    %v352 = vunpack.c.l.b16 %v60
    %v353 = vunpack.c.h.b16 %v60
    %v354 = vunpack.c.l.b16 %v61
    %v355 = vunpack.c.h.b16 %v61
    %v356 = vunpack.c.l.b16 %v62
    %v357 = vunpack.c.h.b16 %v62
    %v358 = vunpack.c.l.b16 %v63
    %v359 = vunpack.c.h.b16 %v63
    %v360 = vunpack.c.l.b16 %v64
    %v361 = vunpack.c.h.b16 %v64
    %v362 = vunpack.c.l.b16 %v65
    %v363 = vunpack.c.h.b16 %v65
    %v364 = vunpack.c.l.b16 %v66
    %v365 = vunpack.c.h.b16 %v66
    %v366 = vunpack.c.l.b16 %v67
    %v367 = vunpack.c.h.b16 %v67
    %v368 = vunpack.c.l.b16 %v68
    %v369 = vunpack.c.h.b16 %v68
    %v370 = vunpack.c.l.b16 %v69
    %v371 = vunpack.c.h.b16 %v69
    %v372 = vunpack.c.l.b16 %v70
    %v373 = vunpack.c.h.b16 %v70
    %v374 = vunpack.c.l.b16 %v71
    %v375 = vunpack.c.h.b16 %v71
    %v376 = vunpack.c.l.b16 %v72
    %v377 = vunpack.c.h.b16 %v72
    %v378 = vunpack.c.l.b16 %v73
    %v379 = vunpack.c.h.b16 %v73
    %v380 = vunpack.c.l.b16 %v74
    %v381 = vunpack.c.h.b16 %v74
    %v382 = vunpack.c.l.b16 %v75
    %v383 = vunpack.c.h.b16 %v75
    %v384 = vunpack.c.l.b16 %v76
    %v385 = vunpack.c.h.b16 %v76
    %v386 = vunpack.c.l.b16 %v77
    %v387 = vunpack.c.h.b16 %v77
    %v388 = vunpack.c.l.b16 %v78
    %v389 = vunpack.c.h.b16 %v78
    %v390 = vunpack.c.l.b16 %v79
    %v391 = vunpack.c.h.b16 %v79
    %v392 = vunpack.c.l.b16 %v80
    %v393 = vunpack.c.h.b16 %v80
    %v394 = vunpack.c.l.b16 %v81
    %v395 = vunpack.c.h.b16 %v81
    %v396 = vunpack.c.l.b16 %v82
    %v397 = vunpack.c.h.b16 %v82
    %v398 = vunpack.c.l.b16 %v83
    %v399 = vunpack.c.h.b16 %v83
    %v400 = vunpack.c.l.b16 %v84
    %v401 = vunpack.c.h.b16 %v84
    %v402 = vunpack.c.l.b16 %v85
    %v403 = vunpack.c.h.b16 %v85
    %v404 = vunpack.c.l.b16 %v86
    %v405 = vunpack.c.h.b16 %v86
    %v406 = vunpack.c.l.b16 %v87
    %v407 = vunpack.c.h.b16 %v87
    %v408 = vunpack.c.l.b16 %v88
    %v409 = vunpack.c.h.b16 %v88
    %v410 = vunpack.c.l.b16 %v89
    %v411 = vunpack.c.h.b16 %v89
    %v412 = vunpack.c.l.b16 %v90
    %v413 = vunpack.c.h.b16 %v90
    %v414 = vunpack.c.l.b16 %v91
    %v415 = vunpack.c.h.b16 %v91
    %v416 = vunpack.c.l.b16 %v92
    %v417 = vunpack.c.h.b16 %v92
    %v418 = vunpack.c.l.b16 %v93
    %v419 = vunpack.c.h.b16 %v93
    %v420 = vunpack.c.l.b16 %v94
    %v421 = vunpack.c.h.b16 %v94
    %v422 = vunpack.c.l.b16 %v95
    %v423 = vunpack.c.h.b16 %v95
    %v424 = vunpack.c.l.b16 %v96
    %v425 = vunpack.c.h.b16 %v96
    %v426 = vunpack.c.l.b16 %v97
    %v427 = vunpack.c.h.b16 %v97
    %v428 = vunpack.c.l.b16 %v98
    %v429 = vunpack.c.h.b16 %v98
    %v430 = vunpack.c.l.b16 %v99
    %v431 = vunpack.c.h.b16 %v99
    %v432 = vunpack.c.l.b16 %v100
    %v433 = vunpack.c.h.b16 %v100
    %v434 = vunpack.c.l.b16 %v101
    %v435 = vunpack.c.h.b16 %v101
    %v436 = vunpack.c.l.b16 %v102
    %v437 = vunpack.c.h.b16 %v102
    %v438 = vunpack.c.l.b16 %v103
    %v439 = vunpack.c.h.b16 %v103
    %v440 = vunpack.c.l.b16 %v104
    %v441 = vunpack.c.h.b16 %v104
    %v442 = vunpack.c.l.b16 %v105
    %v443 = vunpack.c.h.b16 %v105
    %v444 = vunpack.c.l.b16 %v106
    %v445 = vunpack.c.h.b16 %v106
    %v446 = vunpack.c.l.b16 %v107
    %v447 = vunpack.c.h.b16 %v107
    %v448 = vunpack.c.l.b16 %v108
    %v449 = vunpack.c.h.b16 %v108
    %v450 = vunpack.c.l.b16 %v109
    %v451 = vunpack.c.h.b16 %v109
    %v452 = vunpack.c.l.b16 %v110
    %v453 = vunpack.c.h.b16 %v110
    %v454 = vunpack.c.l.b16 %v111
    %v455 = vunpack.c.h.b16 %v111
    %v456 = vunpack.c.l.b16 %v112
    %v457 = vunpack.c.h.b16 %v112
    %v458 = vunpack.c.l.b16 %v113
    %v459 = vunpack.c.h.b16 %v113
    %v460 = vunpack.c.l.b16 %v114
    %v461 = vunpack.c.h.b16 %v114
    %v462 = vunpack.c.l.b16 %v115
    %v463 = vunpack.c.h.b16 %v115
    %v464 = vunpack.c.l.b16 %v116
    %v465 = vunpack.c.h.b16 %v116
    %v466 = vunpack.c.l.b16 %v117
    %v467 = vunpack.c.h.b16 %v117
    %v468 = vunpack.c.l.b16 %v118
    %v469 = vunpack.c.h.b16 %v118
    %v470 = vunpack.c.l.b16 %v119
    %v471 = vunpack.c.h.b16 %v119
    %v472 = vunpack.c.l.b16 %v120
    %v473 = vunpack.c.h.b16 %v120
    %v474 = vunpack.c.l.b16 %v121
    %v475 = vunpack.c.h.b16 %v121
    %v476 = vunpack.c.l.b16 %v122
    %v477 = vunpack.c.h.b16 %v122
    %v478 = vunpack.c.l.b16 %v123
    %v479 = vunpack.c.h.b16 %v123
    %v480 = vunpack.c.l.b16 %v124
    %v481 = vunpack.c.h.b16 %v124
    %v482 = vunpack.c.l.b16 %v125
    %v483 = vunpack.c.h.b16 %v125
    %v484 = vunpack.c.l.b16 %v126
    %v485 = vunpack.c.h.b16 %v126
    %v486 = vunpack.c.l.b16 %v127
    %v487 = vunpack.c.h.b16 %v127
    %v488 = vunpack.c.l.b16 %v128
    %v489 = vunpack.c.h.b16 %v128
    %v490 = vunpack.c.l.b16 %v129
    %v491 = vunpack.c.h.b16 %v129
    %v492 = vunpack.c.l.b16 %v130
    %v493 = vunpack.c.h.b16 %v130
    %v494 = vunpack.c.l.b16 %v131
    %v495 = vunpack.c.h.b16 %v131
    %v496 = vunpack.c.l.b16 %v132
    %v497 = vunpack.c.h.b16 %v132
    %v498 = vunpack.c.l.b16 %v133
    %v499 = vunpack.c.h.b16 %v133
    %v500 = vunpack.c.l.b16 %v134
    %v501 = vunpack.c.h.b16 %v134
    %v502 = vunpack.c.l.b16 %v135
    %v503 = vunpack.c.h.b16 %v135
    %v504 = vunpack.c.l.b16 %v136
    %v505 = vunpack.c.h.b16 %v136
    %v506 = vunpack.c.l.b16 %v137
    %v507 = vunpack.c.h.b16 %v137
    %v508 = vunpack.c.l.b16 %v138
    %v509 = vunpack.c.h.b16 %v138
    %v510 = vunpack.c.l.b16 %v139
    %v511 = vunpack.c.h.b16 %v139
    %v512 = vunpack.c.l.b16 %v140
    %v513 = vunpack.c.h.b16 %v140
    %v514 = vunpack.c.l.b16 %v141
    %v515 = vunpack.c.h.b16 %v141
    %v516 = vunpack.c.l.b16 %v142
    %v517 = vunpack.c.h.b16 %v142
    %v518 = vunpack.c.l.b16 %v143
    %v519 = vunpack.c.h.b16 %v143
    %v520 = vunpack.c.l.b16 %v144
    %v521 = vunpack.c.h.b16 %v144
    %v522 = vunpack.c.l.b16 %v145
    %v523 = vunpack.c.h.b16 %v145
    %v524 = vunpack.c.l.b16 %v146
    %v525 = vunpack.c.h.b16 %v146
    %v526 = vunpack.c.l.b16 %v147
    %v527 = vunpack.c.h.b16 %v147
    %v528 = vunpack.c.l.b16 %v148
    %v529 = vunpack.c.h.b16 %v148
    %v530 = vunpack.c.l.b16 %v149
    %v531 = vunpack.c.h.b16 %v149
    %v532 = vunpack.c.l.b16 %v150
    %v533 = vunpack.c.h.b16 %v150
    %v534 = vunpack.c.l.b16 %v151
    %v535 = vunpack.c.h.b16 %v151
    %v536 = vunpack.c.l.b16 %v152
    %v537 = vunpack.c.h.b16 %v152
    %v538 = vunpack.c.l.b16 %v153
    %v539 = vunpack.c.h.b16 %v153
    %v540 = vunpack.c.l.b16 %v154
    %v541 = vunpack.c.h.b16 %v154
    %v542 = vunpack.c.l.b16 %v155
    %v543 = vunpack.c.h.b16 %v155
    %v544 = vunpack.c.l.b16 %v156
    %v545 = vunpack.c.h.b16 %v156
    %v546 = vunpack.c.l.b16 %v157
    %v547 = vunpack.c.h.b16 %v157
    %v548 = vunpack.c.l.b16 %v158
    %v549 = vunpack.c.h.b16 %v158
    %v550 = vunpack.c.l.b16 %v159
    %v551 = vunpack.c.h.b16 %v159
    %v552 = vunpack.c.l.b16 %v160
    %v553 = vunpack.c.h.b16 %v160
    %v554 = vunpack.c.l.b16 %v161
    %v555 = vunpack.c.h.b16 %v161
    %v556 = vunpack.c.l.b16 %v162
    %v557 = vunpack.c.h.b16 %v162
    %v558 = vunpack.c.l.b16 %v163
    %v559 = vunpack.c.h.b16 %v163
    %v560 = vunpack.c.l.b16 %v164
    %v561 = vunpack.c.h.b16 %v164
    %v562 = vunpack.c.l.b16 %v165
    %v563 = vunpack.c.h.b16 %v165
    %v564 = vunpack.c.l.b16 %v166
    %v565 = vunpack.c.h.b16 %v166
    %v566 = vunpack.c.l.b16 %v167
    %v567 = vunpack.c.h.b16 %v167
    %v568 = vunpack.c.l.b16 %v168
    %v569 = vunpack.c.h.b16 %v168
    %v570 = vunpack.c.l.b16 %v169
    %v571 = vunpack.c.h.b16 %v169
    %v572 = vunpack.c.l.b16 %v170
    %v573 = vunpack.c.h.b16 %v170
    %v574 = vunpack.c.l.b16 %v171
    %v575 = vunpack.c.h.b16 %v171
    %v576 = vunpack.c.l.b16 %v172
    %v577 = vunpack.c.h.b16 %v172
    %v578 = vunpack.c.l.b16 %v173
    %v579 = vunpack.c.h.b16 %v173
    %v580 = vpack.c.b16 %v328, %v324
    %v581 = vpack.c.b16 %v329, %v325
    %v582 = vpack.c.b16 %v330, %v326
    %v583 = vpack.c.b16 %v331, %v327
    %v584 = vpack.c.b16 %v336, %v332
    %v585 = vpack.c.b16 %v337, %v333
    %v586 = vpack.c.b16 %v338, %v334
    %v587 = vpack.c.b16 %v339, %v335
    %v588 = vpack.c.b16 %v344, %v340
    %v589 = vpack.c.b16 %v345, %v341
    %v590 = vpack.c.b16 %v346, %v342
    %v591 = vpack.c.b16 %v347, %v343
    %v592 = vpack.c.b16 %v352, %v348
    %v593 = vpack.c.b16 %v353, %v349
    %v594 = vpack.c.b16 %v354, %v350
    %v595 = vpack.c.b16 %v355, %v351
    %v596 = vpack.c.b16 %v360, %v356
    %v597 = vpack.c.b16 %v361, %v357
    %v598 = vpack.c.b16 %v362, %v358
    %v599 = vpack.c.b16 %v363, %v359
    %v600 = vpack.c.b16 %v368, %v364
    %v601 = vpack.c.b16 %v369, %v365
    %v602 = vpack.c.b16 %v370, %v366
    %v603 = vpack.c.b16 %v371, %v367
    %v604 = vpack.c.b16 %v376, %v372
    %v605 = vpack.c.b16 %v377, %v373
    %v606 = vpack.c.b16 %v378, %v374
    %v607 = vpack.c.b16 %v379, %v375
    %v608 = vpack.c.b16 %v384, %v380
    %v609 = vpack.c.b16 %v385, %v381
    %v610 = vpack.c.b16 %v386, %v382
    %v611 = vpack.c.b16 %v387, %v383
    %v612 = vpack.c.b16 %v392, %v388
    %v613 = vpack.c.b16 %v393, %v389
    %v614 = vpack.c.b16 %v394, %v390
    %v615 = vpack.c.b16 %v395, %v391
    %v616 = vpack.c.b16 %v400, %v396
    %v617 = vpack.c.b16 %v401, %v397
    %v618 = vpack.c.b16 %v402, %v398
    %v619 = vpack.c.b16 %v403, %v399
    %v620 = vpack.c.b16 %v408, %v404
    %v621 = vpack.c.b16 %v409, %v405
    %v622 = vpack.c.b16 %v410, %v406
    %v623 = vpack.c.b16 %v411, %v407
    %v624 = vpack.c.b16 %v416, %v412
    %v625 = vpack.c.b16 %v417, %v413
    %v626 = vpack.c.b16 %v418, %v414
    %v627 = vpack.c.b16 %v419, %v415
    %v628 = vpack.c.b16 %v424, %v420
    %v629 = vpack.c.b16 %v425, %v421
    %v630 = vpack.c.b16 %v426, %v422
    %v631 = vpack.c.b16 %v427, %v423
    %v632 = vpack.c.b16 %v432, %v428
    %v633 = vpack.c.b16 %v433, %v429
    %v634 = vpack.c.b16 %v434, %v430
    %v635 = vpack.c.b16 %v435, %v431
    %v636 = vpack.c.b16 %v440, %v436
    %v637 = vpack.c.b16 %v441, %v437
    %v638 = vpack.c.b16 %v442, %v438
    %v639 = vpack.c.b16 %v443, %v439
    %v640 = vpack.c.b16 %v448, %v444
    %v641 = vpack.c.b16 %v449, %v445
    %v642 = vpack.c.b16 %v450, %v446
    %v643 = vpack.c.b16 %v451, %v447
    %v644 = vpack.c.b16 %v456, %v452
    %v645 = vpack.c.b16 %v457, %v453
    %v646 = vpack.c.b16 %v458, %v454
    %v647 = vpack.c.b16 %v459, %v455
    %v648 = vpack.c.b16 %v464, %v460
    %v649 = vpack.c.b16 %v465, %v461
    %v650 = vpack.c.b16 %v466, %v462
    %v651 = vpack.c.b16 %v467, %v463
    %v652 = vpack.c.b16 %v472, %v468
    %v653 = vpack.c.b16 %v473, %v469
    %v654 = vpack.c.b16 %v474, %v470
    %v655 = vpack.c.b16 %v475, %v471
    %v656 = vpack.c.b16 %v480, %v476
    %v657 = vpack.c.b16 %v481, %v477
    %v658 = vpack.c.b16 %v482, %v478
    %v659 = vpack.c.b16 %v483, %v479
    %v660 = vpack.c.b16 %v488, %v484
    %v661 = vpack.c.b16 %v489, %v485
    %v662 = vpack.c.b16 %v490, %v486
    %v663 = vpack.c.b16 %v491, %v487
    %v664 = vpack.c.b16 %v496, %v492
    %v665 = vpack.c.b16 %v497, %v493
    %v666 = vpack.c.b16 %v498, %v494
    %v667 = vpack.c.b16 %v499, %v495
    %v668 = vpack.c.b16 %v504, %v500
    %v669 = vpack.c.b16 %v505, %v501
    %v670 = vpack.c.b16 %v506, %v502
    %v671 = vpack.c.b16 %v507, %v503
    %v672 = vpack.c.b16 %v512, %v508
    %v673 = vpack.c.b16 %v513, %v509
    %v674 = vpack.c.b16 %v514, %v510
    %v675 = vpack.c.b16 %v515, %v511
    %v676 = vpack.c.b16 %v520, %v516
    %v677 = vpack.c.b16 %v521, %v517
    %v678 = vpack.c.b16 %v522, %v518
    %v679 = vpack.c.b16 %v523, %v519
    %v680 = vpack.c.b16 %v528, %v524
    %v681 = vpack.c.b16 %v529, %v525
    %v682 = vpack.c.b16 %v530, %v526
    %v683 = vpack.c.b16 %v531, %v527
    %v684 = vpack.c.b16 %v536, %v532
    %v685 = vpack.c.b16 %v537, %v533
    %v686 = vpack.c.b16 %v538, %v534
    %v687 = vpack.c.b16 %v539, %v535
    %v688 = vpack.c.b16 %v544, %v540
    %v689 = vpack.c.b16 %v545, %v541
    %v690 = vpack.c.b16 %v546, %v542
    %v691 = vpack.c.b16 %v547, %v543
    %v692 = vpack.c.b16 %v552, %v548
    %v693 = vpack.c.b16 %v553, %v549
    %v694 = vpack.c.b16 %v554, %v550
    %v695 = vpack.c.b16 %v555, %v551
    %v696 = vpack.c.b16 %v560, %v556
    %v697 = vpack.c.b16 %v561, %v557
    %v698 = vpack.c.b16 %v562, %v558
    %v699 = vpack.c.b16 %v563, %v559
    %v700 = vpack.c.b16 %v568, %v564
    %v701 = vpack.c.b16 %v569, %v565
    %v702 = vpack.c.b16 %v570, %v566
    %v703 = vpack.c.b16 %v571, %v567
    %v704 = vpack.c.b16 %v576, %v572
    %v705 = vpack.c.b16 %v577, %v573
    %v706 = vpack.c.b16 %v578, %v574
    %v707 = vpack.c.b16 %v579, %v575
    %836 = vmatprep.subr.bf16.mxu0 %v581
    %837 = vmatpush1.bf16.msra.mxu0 %v580
    %838 = vmatprep.subr.bf16.mxu0 %v585
    %839 = vmatpush1.bf16.msra.mxu0 %v584
    %840 = vmatprep.subr.bf16.mxu0 %v589
    %841 = vmatpush1.bf16.msra.mxu0 %v588
    %842 = vmatprep.subr.bf16.mxu0 %v593
    %843 = vmatpush1.bf16.msra.mxu0 %v592
    %844 = vmatprep.subr.bf16.mxu0 %v597
    %845 = vmatpush1.bf16.msra.mxu0 %v596
    %846 = vmatprep.subr.bf16.mxu0 %v601
    %847 = vmatpush1.bf16.msra.mxu0 %v600
    %848 = vmatprep.subr.bf16.mxu0 %v605
    %849 = vmatpush1.bf16.msra.mxu0 %v604
    %850 = vmatprep.subr.bf16.mxu0 %v609
    %851 = vmatpush1.bf16.msra.mxu0 %v608
    %852 = vmatprep.subr.bf16.mxu0 %v613
    %853 = vmatpush1.bf16.msra.mxu0 %v612
    %854 = vmatprep.subr.bf16.mxu0 %v617
    %855 = vmatpush1.bf16.msra.mxu0 %v616
    %856 = vmatprep.subr.bf16.mxu0 %v621
    %857 = vmatpush1.bf16.msra.mxu0 %v620
    %858 = vmatprep.subr.bf16.mxu0 %v625
    %859 = vmatpush1.bf16.msra.mxu0 %v624
    %860 = vmatprep.subr.bf16.mxu0 %v629
    %861 = vmatpush1.bf16.msra.mxu0 %v628
    %862 = vmatprep.subr.bf16.mxu0 %v633
    %863 = vmatpush1.bf16.msra.mxu0 %v632
    %864 = vmatprep.subr.bf16.mxu0 %v637
    %865 = vmatpush1.bf16.msra.mxu0 %v636
    %866 = vmatprep.subr.bf16.mxu0 %v641
    %867 = vmatpush1.bf16.msra.mxu0 %v640
    %868 = vmatprep.mubr.bf16.mxu0 %v43
    %869 = vmatmul.mubr.bf16.gmra.mrb[0].mxu0 %v42
    %v870 = vpop.f32.mrb[0].mxu0
    %v871 = vadd.f32 %v179, %v870
    %v872 = vpop.f32.mrb[0].mxu0
    %v873 = vadd.f32 %v183, %v872
    %v874 = vpop.f32.mrb[0].mxu0
    %v875 = vpop.f32.mrb[0].mxu0
    %876 = vdwg.mxu0
    %877 = vmatprep.subr.bf16.mxu0 %v645
    %878 = vmatpush1.bf16.msra.mxu0 %v644
    %879 = vmatprep.subr.bf16.mxu0 %v649
    %880 = vmatpush1.bf16.msra.mxu0 %v648
    %881 = vmatprep.subr.bf16.mxu0 %v653
    %882 = vmatpush1.bf16.msra.mxu0 %v652
    %883 = vmatprep.subr.bf16.mxu0 %v657
    %884 = vmatpush1.bf16.msra.mxu0 %v656
    %885 = vmatprep.subr.bf16.mxu0 %v661
    %886 = vmatpush1.bf16.msra.mxu0 %v660
    %887 = vmatprep.subr.bf16.mxu0 %v665
    %888 = vmatpush1.bf16.msra.mxu0 %v664
    %889 = vmatprep.subr.bf16.mxu0 %v669
    %890 = vmatpush1.bf16.msra.mxu0 %v668
    %891 = vmatprep.subr.bf16.mxu0 %v673
    %892 = vmatpush1.bf16.msra.mxu0 %v672
    %893 = vmatprep.subr.bf16.mxu0 %v677
    %894 = vmatpush1.bf16.msra.mxu0 %v676
    %895 = vmatprep.subr.bf16.mxu0 %v681
    %896 = vmatpush1.bf16.msra.mxu0 %v680
    %897 = vmatprep.subr.bf16.mxu0 %v685
    %898 = vmatpush1.bf16.msra.mxu0 %v684
    %899 = vmatprep.subr.bf16.mxu0 %v689
    %900 = vmatpush1.bf16.msra.mxu0 %v688
    %901 = vmatprep.subr.bf16.mxu0 %v693
    %902 = vmatpush1.bf16.msra.mxu0 %v692
    %903 = vmatprep.subr.bf16.mxu0 %v697
    %904 = vmatpush1.bf16.msra.mxu0 %v696
    %905 = vmatprep.subr.bf16.mxu0 %v701
    %906 = vmatpush1.bf16.msra.mxu0 %v700
    %907 = vmatprep.subr.bf16.mxu0 %v705
    %908 = vmatpush1.bf16.msra.mxu0 %v704
    %909 = vmatprep.mubr.bf16.mxu0 %v45
    %910 = vmatmul.mubr.bf16.gmra.mrb[0].mxu0 %v44
    %v911 = vpop.f32.mrb[0].mxu0
    %v912 = vadd.f32 %v871, %v911
    %v913 = vpop.f32.mrb[0].mxu0
    %v914 = vadd.f32 %v873, %v913
    %v915 = vpop.f32.mrb[0].mxu0
    %v916 = vpop.f32.mrb[0].mxu0
    %917 = vdwg.mxu0
    %918 = vmatprep.subr.bf16.mxu0 %v583
    %919 = vmatpush1.bf16.msra.mxu0 %v582
    %920 = vmatprep.subr.bf16.mxu0 %v587
    %921 = vmatpush1.bf16.msra.mxu0 %v586
    %922 = vmatprep.subr.bf16.mxu0 %v591
    %923 = vmatpush1.bf16.msra.mxu0 %v590
    %924 = vmatprep.subr.bf16.mxu0 %v595
    %925 = vmatpush1.bf16.msra.mxu0 %v594
    %926 = vmatprep.subr.bf16.mxu0 %v599
    %927 = vmatpush1.bf16.msra.mxu0 %v598
    %928 = vmatprep.subr.bf16.mxu0 %v603
    %929 = vmatpush1.bf16.msra.mxu0 %v602
    %930 = vmatprep.subr.bf16.mxu0 %v607
    %931 = vmatpush1.bf16.msra.mxu0 %v606
    %932 = vmatprep.subr.bf16.mxu0 %v611
    %933 = vmatpush1.bf16.msra.mxu0 %v610
    %934 = vmatprep.subr.bf16.mxu0 %v615
    %935 = vmatpush1.bf16.msra.mxu0 %v614
    %936 = vmatprep.subr.bf16.mxu0 %v619
    %937 = vmatpush1.bf16.msra.mxu0 %v618
    %938 = vmatprep.subr.bf16.mxu0 %v623
    %939 = vmatpush1.bf16.msra.mxu0 %v622
    %940 = vmatprep.subr.bf16.mxu0 %v627
    %941 = vmatpush1.bf16.msra.mxu0 %v626
    %942 = vmatprep.subr.bf16.mxu0 %v631
    %943 = vmatpush1.bf16.msra.mxu0 %v630
    %944 = vmatprep.subr.bf16.mxu0 %v635
    %945 = vmatpush1.bf16.msra.mxu0 %v634
    %946 = vmatprep.subr.bf16.mxu0 %v639
    %947 = vmatpush1.bf16.msra.mxu0 %v638
    %948 = vmatprep.subr.bf16.mxu0 %v643
    %949 = vmatpush1.bf16.msra.mxu0 %v642
    %950 = vmatprep.mubr.bf16.mxu0 %v43
    %951 = vmatmul.mubr.bf16.gmra.mrb[0].mxu0 %v42
    %v952 = vpop.f32.mrb[0].mxu0
    %v953 = vadd.f32 %v187, %v952
    %v954 = vpop.f32.mrb[0].mxu0
    %v955 = vadd.f32 %v191, %v954
    %v956 = vpop.f32.mrb[0].mxu0
    %v957 = vpop.f32.mrb[0].mxu0
    %958 = vdwg.mxu0
    %959 = vmatprep.subr.bf16.mxu0 %v647
    %960 = vmatpush1.bf16.msra.mxu0 %v646
    %961 = vmatprep.subr.bf16.mxu0 %v651
    %962 = vmatpush1.bf16.msra.mxu0 %v650
    %963 = vmatprep.subr.bf16.mxu0 %v655
    %964 = vmatpush1.bf16.msra.mxu0 %v654
    %965 = vmatprep.subr.bf16.mxu0 %v659
    %966 = vmatpush1.bf16.msra.mxu0 %v658
    %967 = vmatprep.subr.bf16.mxu0 %v663
    %968 = vmatpush1.bf16.msra.mxu0 %v662
    %969 = vmatprep.subr.bf16.mxu0 %v667
    %970 = vmatpush1.bf16.msra.mxu0 %v666
    %971 = vmatprep.subr.bf16.mxu0 %v671
    %972 = vmatpush1.bf16.msra.mxu0 %v670
    %973 = vmatprep.subr.bf16.mxu0 %v675
    %974 = vmatpush1.bf16.msra.mxu0 %v674
    %975 = vmatprep.subr.bf16.mxu0 %v679
    %976 = vmatpush1.bf16.msra.mxu0 %v678
    %977 = vmatprep.subr.bf16.mxu0 %v683
    %978 = vmatpush1.bf16.msra.mxu0 %v682
    %979 = vmatprep.subr.bf16.mxu0 %v687
    %980 = vmatpush1.bf16.msra.mxu0 %v686
    %981 = vmatprep.subr.bf16.mxu0 %v691
    %982 = vmatpush1.bf16.msra.mxu0 %v690
    %983 = vmatprep.subr.bf16.mxu0 %v695
    %984 = vmatpush1.bf16.msra.mxu0 %v694
    %985 = vmatprep.subr.bf16.mxu0 %v699
    %986 = vmatpush1.bf16.msra.mxu0 %v698
    %987 = vmatprep.subr.bf16.mxu0 %v703
    %988 = vmatpush1.bf16.msra.mxu0 %v702
    %989 = vmatprep.subr.bf16.mxu0 %v707
    %990 = vmatpush1.bf16.msra.mxu0 %v706
    %991 = vmatprep.mubr.bf16.mxu0 %v45
    %992 = vmatmul.mubr.bf16.gmra.mrb[0].mxu0 %v44
    %v993 = vpop.f32.mrb[0].mxu0
    %v994 = vadd.f32 %v953, %v993
    %v995 = vpop.f32.mrb[0].mxu0
    %v996 = vadd.f32 %v955, %v995
    %v997 = vpop.f32.mrb[0].mxu0
    %v998 = vpop.f32.mrb[0].mxu0
    %999 = vdwg.mxu0
    %v1000 = vmax.f32 %v912, 0.0
    %v1001 = vmax.f32 %v914, 0.0
    %v1002 = vmax.f32 %v994, 0.0
    %v1003 = vmax.f32 %v996, 0.0
    %v1004 = vpack.c.bf16 %v1000, %v1000
    %v1005 = vpack.c.bf16 %v1001, %v1001
    %v1006 = vpack.c.bf16 %v1002, %v1002
    %v1007 = vpack.c.bf16 %v1003, %v1003
    %v1008 = vld [vmem:[%s4] sm:$0xff]
    %v1009 = vld [vmem:[%s4 + $0x8] sm:$0xff]
    %v1010 = vld [vmem:[%s4 + $0x10] sm:$0xff]
    %v1011 = vld [vmem:[%s4 + $0x18] sm:$0xff]
    %v1012 = vld [vmem:[%s4 + $0x20] sm:$0xff]
    %v1013 = vld [vmem:[%s4 + $0x28] sm:$0xff]
    %v1014 = vld [vmem:[%s4 + $0x30] sm:$0xff]
    %v1015 = vld [vmem:[%s4 + $0x38] sm:$0xff]
    %v1016 = vld [vmem:[%s4 + $0x40] sm:$0xff]
    %v1017 = vld [vmem:[%s4 + $0x48] sm:$0xff]
    %v1018 = vld [vmem:[%s4 + $0x50] sm:$0xff]
    %v1019 = vld [vmem:[%s4 + $0x58] sm:$0xff]
    %v1020 = vld [vmem:[%s4 + $0x60] sm:$0xff]
    %v1021 = vld [vmem:[%s4 + $0x68] sm:$0xff]
    %v1022 = vld [vmem:[%s4 + $0x70] sm:$0xff]
    %v1023 = vld [vmem:[%s4 + $0x78] sm:$0xff]
    %v1024 = vld [vmem:[%s4 + $0x80] sm:$0xff]
    %v1025 = vld [vmem:[%s4 + $0x88] sm:$0xff]
    %v1026 = vld [vmem:[%s4 + $0x90] sm:$0xff]
    %v1027 = vld [vmem:[%s4 + $0x98] sm:$0xff]
    %v1028 = vld [vmem:[%s4 + $0xa0] sm:$0xff]
    %v1029 = vld [vmem:[%s4 + $0xa8] sm:$0xff]
    %v1030 = vld [vmem:[%s4 + $0xb0] sm:$0xff]
    %v1031 = vld [vmem:[%s4 + $0xb8] sm:$0xff]
    %v1032 = vld [vmem:[%s4 + $0xc0] sm:$0xff]
    %v1033 = vld [vmem:[%s4 + $0xc8] sm:$0xff]
    %v1034 = vld [vmem:[%s4 + $0xd0] sm:$0xff]
    %v1035 = vld [vmem:[%s4 + $0xd8] sm:$0xff]
    %v1036 = vld [vmem:[%s4 + $0xe0] sm:$0xff]
    %v1037 = vld [vmem:[%s4 + $0xe8] sm:$0xff]
    %v1038 = vld [vmem:[%s4 + $0xf0] sm:$0xff]
    %v1039 = vld [vmem:[%s4 + $0xf8] sm:$0xff]
    %v1040 = vld [vmem:[%s4 + $0x100] sm:$0xff]
    %v1041 = vld [vmem:[%s4 + $0x108] sm:$0xff]
    %v1042 = vld [vmem:[%s4 + $0x110] sm:$0xff]
    %v1043 = vld [vmem:[%s4 + $0x118] sm:$0xff]
    %v1044 = vld [vmem:[%s4 + $0x120] sm:$0xff]
    %v1045 = vld [vmem:[%s4 + $0x128] sm:$0xff]
    %v1046 = vld [vmem:[%s4 + $0x130] sm:$0xff]
    %v1047 = vld [vmem:[%s4 + $0x138] sm:$0xff]
    %v1048 = vld [vmem:[%s4 + $0x140] sm:$0xff]
    %v1049 = vld [vmem:[%s4 + $0x148] sm:$0xff]
    %v1050 = vld [vmem:[%s4 + $0x150] sm:$0xff]
    %v1051 = vld [vmem:[%s4 + $0x158] sm:$0xff]
    %v1052 = vld [vmem:[%s4 + $0x160] sm:$0xff]
    %v1053 = vld [vmem:[%s4 + $0x168] sm:$0xff]
    %v1054 = vld [vmem:[%s4 + $0x170] sm:$0xff]
    %v1055 = vld [vmem:[%s4 + $0x178] sm:$0xff]
    %v1056 = vld [vmem:[%s4 + $0x180] sm:$0xff]
    %v1057 = vld [vmem:[%s4 + $0x188] sm:$0xff]
    %v1058 = vld [vmem:[%s4 + $0x190] sm:$0xff]
    %v1059 = vld [vmem:[%s4 + $0x198] sm:$0xff]
    %v1060 = vld [vmem:[%s4 + $0x1a0] sm:$0xff]
    %v1061 = vld [vmem:[%s4 + $0x1a8] sm:$0xff]
    %v1062 = vld [vmem:[%s4 + $0x1b0] sm:$0xff]
    %v1063 = vld [vmem:[%s4 + $0x1b8] sm:$0xff]
    %v1064 = vld [vmem:[%s4 + $0x1c0] sm:$0xff]
    %v1065 = vld [vmem:[%s4 + $0x1c8] sm:$0xff]
    %v1066 = vld [vmem:[%s4 + $0x1d0] sm:$0xff]
    %v1067 = vld [vmem:[%s4 + $0x1d8] sm:$0xff]
    %v1068 = vld [vmem:[%s4 + $0x1e0] sm:$0xff]
    %v1069 = vld [vmem:[%s4 + $0x1e8] sm:$0xff]
    %v1070 = vld [vmem:[%s4 + $0x1f0] sm:$0xff]
    %v1071 = vld [vmem:[%s4 + $0x1f8] sm:$0xff]
    %v1072 = vld [vmem:[%s5] sm:$0x3]
    %v1074 = vlaneseq
    %v1075 = vshrl.u32 %v1074, 7
    %v1076 = vsub.s32 0, %v1075
    %v1077 = vrot.slane %v1072, %v1076
    %v1078 = vlaneseq
    %v1079 = vshrl.u32 %v1078, 7
    %v1080 = vsub.s32 1, %v1079
    %v1081 = vrot.slane %v1072, %v1080
    %v1148 = vunpack.c.l.b16 %v1008
    %v1149 = vunpack.c.h.b16 %v1008
    %v1150 = vunpack.c.l.b16 %v1009
    %v1151 = vunpack.c.h.b16 %v1009
    %v1152 = vunpack.c.l.b16 %v1010
    %v1153 = vunpack.c.h.b16 %v1010
    %v1154 = vunpack.c.l.b16 %v1011
    %v1155 = vunpack.c.h.b16 %v1011
    %v1156 = vunpack.c.l.b16 %v1012
    %v1157 = vunpack.c.h.b16 %v1012
    %v1158 = vunpack.c.l.b16 %v1013
    %v1159 = vunpack.c.h.b16 %v1013
    %v1160 = vunpack.c.l.b16 %v1014
    %v1161 = vunpack.c.h.b16 %v1014
    %v1162 = vunpack.c.l.b16 %v1015
    %v1163 = vunpack.c.h.b16 %v1015
    %v1164 = vunpack.c.l.b16 %v1016
    %v1165 = vunpack.c.h.b16 %v1016
    %v1166 = vunpack.c.l.b16 %v1017
    %v1167 = vunpack.c.h.b16 %v1017
    %v1168 = vunpack.c.l.b16 %v1018
    %v1169 = vunpack.c.h.b16 %v1018
    %v1170 = vunpack.c.l.b16 %v1019
    %v1171 = vunpack.c.h.b16 %v1019
    %v1172 = vunpack.c.l.b16 %v1020
    %v1173 = vunpack.c.h.b16 %v1020
    %v1174 = vunpack.c.l.b16 %v1021
    %v1175 = vunpack.c.h.b16 %v1021
    %v1176 = vunpack.c.l.b16 %v1022
    %v1177 = vunpack.c.h.b16 %v1022
    %v1178 = vunpack.c.l.b16 %v1023
    %v1179 = vunpack.c.h.b16 %v1023
    %v1180 = vunpack.c.l.b16 %v1024
    %v1181 = vunpack.c.h.b16 %v1024
    %v1182 = vunpack.c.l.b16 %v1025
    %v1183 = vunpack.c.h.b16 %v1025
    %v1184 = vunpack.c.l.b16 %v1026
    %v1185 = vunpack.c.h.b16 %v1026
    %v1186 = vunpack.c.l.b16 %v1027
    %v1187 = vunpack.c.h.b16 %v1027
    %v1188 = vunpack.c.l.b16 %v1028
    %v1189 = vunpack.c.h.b16 %v1028
    %v1190 = vunpack.c.l.b16 %v1029
    %v1191 = vunpack.c.h.b16 %v1029
    %v1192 = vunpack.c.l.b16 %v1030
    %v1193 = vunpack.c.h.b16 %v1030
    %v1194 = vunpack.c.l.b16 %v1031
    %v1195 = vunpack.c.h.b16 %v1031
    %v1196 = vunpack.c.l.b16 %v1032
    %v1197 = vunpack.c.h.b16 %v1032
    %v1198 = vunpack.c.l.b16 %v1033
    %v1199 = vunpack.c.h.b16 %v1033
    %v1200 = vunpack.c.l.b16 %v1034
    %v1201 = vunpack.c.h.b16 %v1034
    %v1202 = vunpack.c.l.b16 %v1035
    %v1203 = vunpack.c.h.b16 %v1035
    %v1204 = vunpack.c.l.b16 %v1036
    %v1205 = vunpack.c.h.b16 %v1036
    %v1206 = vunpack.c.l.b16 %v1037
    %v1207 = vunpack.c.h.b16 %v1037
    %v1208 = vunpack.c.l.b16 %v1038
    %v1209 = vunpack.c.h.b16 %v1038
    %v1210 = vunpack.c.l.b16 %v1039
    %v1211 = vunpack.c.h.b16 %v1039
    %v1212 = vunpack.c.l.b16 %v1040
    %v1213 = vunpack.c.h.b16 %v1040
    %v1214 = vunpack.c.l.b16 %v1041
    %v1215 = vunpack.c.h.b16 %v1041
    %v1216 = vunpack.c.l.b16 %v1042
    %v1217 = vunpack.c.h.b16 %v1042
    %v1218 = vunpack.c.l.b16 %v1043
    %v1219 = vunpack.c.h.b16 %v1043
    %v1220 = vunpack.c.l.b16 %v1044
    %v1221 = vunpack.c.h.b16 %v1044
    %v1222 = vunpack.c.l.b16 %v1045
    %v1223 = vunpack.c.h.b16 %v1045
    %v1224 = vunpack.c.l.b16 %v1046
    %v1225 = vunpack.c.h.b16 %v1046
    %v1226 = vunpack.c.l.b16 %v1047
    %v1227 = vunpack.c.h.b16 %v1047
    %v1228 = vunpack.c.l.b16 %v1048
    %v1229 = vunpack.c.h.b16 %v1048
    %v1230 = vunpack.c.l.b16 %v1049
    %v1231 = vunpack.c.h.b16 %v1049
    %v1232 = vunpack.c.l.b16 %v1050
    %v1233 = vunpack.c.h.b16 %v1050
    %v1234 = vunpack.c.l.b16 %v1051
    %v1235 = vunpack.c.h.b16 %v1051
    %v1236 = vunpack.c.l.b16 %v1052
    %v1237 = vunpack.c.h.b16 %v1052
    %v1238 = vunpack.c.l.b16 %v1053
    %v1239 = vunpack.c.h.b16 %v1053
    %v1240 = vunpack.c.l.b16 %v1054
    %v1241 = vunpack.c.h.b16 %v1054
    %v1242 = vunpack.c.l.b16 %v1055
    %v1243 = vunpack.c.h.b16 %v1055
    %v1244 = vunpack.c.l.b16 %v1056
    %v1245 = vunpack.c.h.b16 %v1056
    %v1246 = vunpack.c.l.b16 %v1057
    %v1247 = vunpack.c.h.b16 %v1057
    %v1248 = vunpack.c.l.b16 %v1058
    %v1249 = vunpack.c.h.b16 %v1058
    %v1250 = vunpack.c.l.b16 %v1059
    %v1251 = vunpack.c.h.b16 %v1059
    %v1252 = vunpack.c.l.b16 %v1060
    %v1253 = vunpack.c.h.b16 %v1060
    %v1254 = vunpack.c.l.b16 %v1061
    %v1255 = vunpack.c.h.b16 %v1061
    %v1256 = vunpack.c.l.b16 %v1062
    %v1257 = vunpack.c.h.b16 %v1062
    %v1258 = vunpack.c.l.b16 %v1063
    %v1259 = vunpack.c.h.b16 %v1063
    %v1260 = vunpack.c.l.b16 %v1064
    %v1261 = vunpack.c.h.b16 %v1064
    %v1262 = vunpack.c.l.b16 %v1065
    %v1263 = vunpack.c.h.b16 %v1065
    %v1264 = vunpack.c.l.b16 %v1066
    %v1265 = vunpack.c.h.b16 %v1066
    %v1266 = vunpack.c.l.b16 %v1067
    %v1267 = vunpack.c.h.b16 %v1067
    %v1268 = vunpack.c.l.b16 %v1068
    %v1269 = vunpack.c.h.b16 %v1068
    %v1270 = vunpack.c.l.b16 %v1069
    %v1271 = vunpack.c.h.b16 %v1069
    %v1272 = vunpack.c.l.b16 %v1070
    %v1273 = vunpack.c.h.b16 %v1070
    %v1274 = vunpack.c.l.b16 %v1071
    %v1275 = vunpack.c.h.b16 %v1071
    %v1276 = vpack.c.b16 %v1150, %v1148
    %v1277 = vpack.c.b16 %v1151, %v1149
    %v1278 = vpack.c.b16 %v1154, %v1152
    %v1279 = vpack.c.b16 %v1155, %v1153
    %v1280 = vpack.c.b16 %v1158, %v1156
    %v1281 = vpack.c.b16 %v1159, %v1157
    %v1282 = vpack.c.b16 %v1162, %v1160
    %v1283 = vpack.c.b16 %v1163, %v1161
    %v1284 = vpack.c.b16 %v1166, %v1164
    %v1285 = vpack.c.b16 %v1167, %v1165
    %v1286 = vpack.c.b16 %v1170, %v1168
    %v1287 = vpack.c.b16 %v1171, %v1169
    %v1288 = vpack.c.b16 %v1174, %v1172
    %v1289 = vpack.c.b16 %v1175, %v1173
    %v1290 = vpack.c.b16 %v1178, %v1176
    %v1291 = vpack.c.b16 %v1179, %v1177
    %v1292 = vpack.c.b16 %v1182, %v1180
    %v1293 = vpack.c.b16 %v1183, %v1181
    %v1294 = vpack.c.b16 %v1186, %v1184
    %v1295 = vpack.c.b16 %v1187, %v1185
    %v1296 = vpack.c.b16 %v1190, %v1188
    %v1297 = vpack.c.b16 %v1191, %v1189
    %v1298 = vpack.c.b16 %v1194, %v1192
    %v1299 = vpack.c.b16 %v1195, %v1193
    %v1300 = vpack.c.b16 %v1198, %v1196
    %v1301 = vpack.c.b16 %v1199, %v1197
    %v1302 = vpack.c.b16 %v1202, %v1200
    %v1303 = vpack.c.b16 %v1203, %v1201
    %v1304 = vpack.c.b16 %v1206, %v1204
    %v1305 = vpack.c.b16 %v1207, %v1205
    %v1306 = vpack.c.b16 %v1210, %v1208
    %v1307 = vpack.c.b16 %v1211, %v1209
    %v1308 = vpack.c.b16 %v1214, %v1212
    %v1309 = vpack.c.b16 %v1215, %v1213
    %v1310 = vpack.c.b16 %v1218, %v1216
    %v1311 = vpack.c.b16 %v1219, %v1217
    %v1312 = vpack.c.b16 %v1222, %v1220
    %v1313 = vpack.c.b16 %v1223, %v1221
    %v1314 = vpack.c.b16 %v1226, %v1224
    %v1315 = vpack.c.b16 %v1227, %v1225
    %v1316 = vpack.c.b16 %v1230, %v1228
    %v1317 = vpack.c.b16 %v1231, %v1229
    %v1318 = vpack.c.b16 %v1234, %v1232
    %v1319 = vpack.c.b16 %v1235, %v1233
    %v1320 = vpack.c.b16 %v1238, %v1236
    %v1321 = vpack.c.b16 %v1239, %v1237
    %v1322 = vpack.c.b16 %v1242, %v1240
    %v1323 = vpack.c.b16 %v1243, %v1241
    %v1324 = vpack.c.b16 %v1246, %v1244
    %v1325 = vpack.c.b16 %v1247, %v1245
    %v1326 = vpack.c.b16 %v1250, %v1248
    %v1327 = vpack.c.b16 %v1251, %v1249
    %v1328 = vpack.c.b16 %v1254, %v1252
    %v1329 = vpack.c.b16 %v1255, %v1253
    %v1330 = vpack.c.b16 %v1258, %v1256
    %v1331 = vpack.c.b16 %v1259, %v1257
    %v1332 = vpack.c.b16 %v1262, %v1260
    %v1333 = vpack.c.b16 %v1263, %v1261
    %v1334 = vpack.c.b16 %v1266, %v1264
    %v1335 = vpack.c.b16 %v1267, %v1265
    %v1336 = vpack.c.b16 %v1270, %v1268
    %v1337 = vpack.c.b16 %v1271, %v1269
    %v1338 = vpack.c.b16 %v1274, %v1272
    %v1339 = vpack.c.b16 %v1275, %v1273
    %1404 = vmatprep.subr.bf16.mxu0 %v1277
    %1405 = vmatpush1.bf16.msra.mxu0 %v1276
    %1406 = vmatprep.subr.bf16.mxu0 %v1279
    %1407 = vmatpush1.bf16.msra.mxu0 %v1278
    %1408 = vmatprep.subr.bf16.mxu0 %v1281
    %1409 = vmatpush1.bf16.msra.mxu0 %v1280
    %1410 = vmatprep.subr.bf16.mxu0 %v1283
    %1411 = vmatpush1.bf16.msra.mxu0 %v1282
    %1412 = vmatprep.subr.bf16.mxu0 %v1285
    %1413 = vmatpush1.bf16.msra.mxu0 %v1284
    %1414 = vmatprep.subr.bf16.mxu0 %v1287
    %1415 = vmatpush1.bf16.msra.mxu0 %v1286
    %1416 = vmatprep.subr.bf16.mxu0 %v1289
    %1417 = vmatpush1.bf16.msra.mxu0 %v1288
    %1418 = vmatprep.subr.bf16.mxu0 %v1291
    %1419 = vmatpush1.bf16.msra.mxu0 %v1290
    %1420 = vmatprep.subr.bf16.mxu0 %v1293
    %1421 = vmatpush1.bf16.msra.mxu0 %v1292
    %1422 = vmatprep.subr.bf16.mxu0 %v1295
    %1423 = vmatpush1.bf16.msra.mxu0 %v1294
    %1424 = vmatprep.subr.bf16.mxu0 %v1297
    %1425 = vmatpush1.bf16.msra.mxu0 %v1296
    %1426 = vmatprep.subr.bf16.mxu0 %v1299
    %1427 = vmatpush1.bf16.msra.mxu0 %v1298
    %1428 = vmatprep.subr.bf16.mxu0 %v1301
    %1429 = vmatpush1.bf16.msra.mxu0 %v1300
    %1430 = vmatprep.subr.bf16.mxu0 %v1303
    %1431 = vmatpush1.bf16.msra.mxu0 %v1302
    %1432 = vmatprep.subr.bf16.mxu0 %v1305
    %1433 = vmatpush1.bf16.msra.mxu0 %v1304
    %1434 = vmatprep.subr.bf16.mxu0 %v1307
    %1435 = vmatpush1.bf16.msra.mxu0 %v1306
    %1436 = vmatprep.mubr.bf16.mxu0 %v1005
    %1437 = vmatmul.mubr.bf16.gmra.mrb[0].mxu0 %v1004
    %v1438 = vpop.f32.mrb[0].mxu0
    %v1439 = vadd.f32 %v1077, %v1438
    %v1440 = vpop.f32.mrb[0].mxu0
    %v1441 = vadd.f32 %v1081, %v1440
    %v1442 = vpop.f32.mrb[0].mxu0
    %v1443 = vpop.f32.mrb[0].mxu0
    %1444 = vdwg.mxu0
    %1445 = vmatprep.subr.bf16.mxu0 %v1309
    %1446 = vmatpush1.bf16.msra.mxu0 %v1308
    %1447 = vmatprep.subr.bf16.mxu0 %v1311
    %1448 = vmatpush1.bf16.msra.mxu0 %v1310
    %1449 = vmatprep.subr.bf16.mxu0 %v1313
    %1450 = vmatpush1.bf16.msra.mxu0 %v1312
    %1451 = vmatprep.subr.bf16.mxu0 %v1315
    %1452 = vmatpush1.bf16.msra.mxu0 %v1314
    %1453 = vmatprep.subr.bf16.mxu0 %v1317
    %1454 = vmatpush1.bf16.msra.mxu0 %v1316
    %1455 = vmatprep.subr.bf16.mxu0 %v1319
    %1456 = vmatpush1.bf16.msra.mxu0 %v1318
    %1457 = vmatprep.subr.bf16.mxu0 %v1321
    %1458 = vmatpush1.bf16.msra.mxu0 %v1320
    %1459 = vmatprep.subr.bf16.mxu0 %v1323
    %1460 = vmatpush1.bf16.msra.mxu0 %v1322
    %1461 = vmatprep.subr.bf16.mxu0 %v1325
    %1462 = vmatpush1.bf16.msra.mxu0 %v1324
    %1463 = vmatprep.subr.bf16.mxu0 %v1327
    %1464 = vmatpush1.bf16.msra.mxu0 %v1326
    %1465 = vmatprep.subr.bf16.mxu0 %v1329
    %1466 = vmatpush1.bf16.msra.mxu0 %v1328
    %1467 = vmatprep.subr.bf16.mxu0 %v1331
    %1468 = vmatpush1.bf16.msra.mxu0 %v1330
    %1469 = vmatprep.subr.bf16.mxu0 %v1333
    %1470 = vmatpush1.bf16.msra.mxu0 %v1332
    %1471 = vmatprep.subr.bf16.mxu0 %v1335
    %1472 = vmatpush1.bf16.msra.mxu0 %v1334
    %1473 = vmatprep.subr.bf16.mxu0 %v1337
    %1474 = vmatpush1.bf16.msra.mxu0 %v1336
    %1475 = vmatprep.subr.bf16.mxu0 %v1339
    %1476 = vmatpush1.bf16.msra.mxu0 %v1338
    %1477 = vmatprep.mubr.bf16.mxu0 %v1007
    %1478 = vmatmul.mubr.bf16.gmra.mrb[0].mxu0 %v1006
    %v1479 = vpop.f32.mrb[0].mxu0
    %v1480 = vadd.f32 %v1439, %v1479
    %v1481 = vpop.f32.mrb[0].mxu0
    %v1482 = vadd.f32 %v1441, %v1481
    %v1483 = vpop.f32.mrb[0].mxu0
    %v1484 = vpop.f32.mrb[0].mxu0
    %1485 = vdwg.mxu0
    %v1486 = vmax.f32 %v1480, 0.0
    %v1487 = vmax.f32 %v1482, 0.0
    %v1488 = vpack.c.bf16 %v1486, %v1486
    %v1489 = vpack.c.bf16 %v1487, %v1487
    %v1490 = vld [vmem:[%s6] sm:$0xf]
    %v1491 = vld [vmem:[%s6 + $0x4] sm:$0xf]
    %v1492 = vld [vmem:[%s6 + $0x8] sm:$0xf]
    %v1493 = vld [vmem:[%s6 + $0xc] sm:$0xf]
    %v1494 = vld [vmem:[%s6 + $0x10] sm:$0xf]
    %v1495 = vld [vmem:[%s6 + $0x14] sm:$0xf]
    %v1496 = vld [vmem:[%s6 + $0x18] sm:$0xf]
    %v1497 = vld [vmem:[%s6 + $0x1c] sm:$0xf]
    %v1498 = vld [vmem:[%s6 + $0x20] sm:$0xf]
    %v1499 = vld [vmem:[%s6 + $0x24] sm:$0xf]
    %v1500 = vld [vmem:[%s6 + $0x28] sm:$0xf]
    %v1501 = vld [vmem:[%s6 + $0x2c] sm:$0xf]
    %v1502 = vld [vmem:[%s6 + $0x30] sm:$0xf]
    %v1503 = vld [vmem:[%s6 + $0x34] sm:$0xf]
    %v1504 = vld [vmem:[%s6 + $0x38] sm:$0xf]
    %v1505 = vld [vmem:[%s6 + $0x3c] sm:$0xf]
    %v1506 = vld [vmem:[%s6 + $0x40] sm:$0xf]
    %v1507 = vld [vmem:[%s6 + $0x44] sm:$0xf]
    %v1508 = vld [vmem:[%s6 + $0x48] sm:$0xf]
    %v1509 = vld [vmem:[%s6 + $0x4c] sm:$0xf]
    %v1510 = vld [vmem:[%s6 + $0x50] sm:$0xf]
    %v1511 = vld [vmem:[%s6 + $0x54] sm:$0xf]
    %v1512 = vld [vmem:[%s6 + $0x58] sm:$0xf]
    %v1513 = vld [vmem:[%s6 + $0x5c] sm:$0xf]
    %v1514 = vld [vmem:[%s6 + $0x60] sm:$0xf]
    %v1515 = vld [vmem:[%s6 + $0x64] sm:$0xf]
    %v1516 = vld [vmem:[%s6 + $0x68] sm:$0xf]
    %v1517 = vld [vmem:[%s6 + $0x6c] sm:$0xf]
    %v1518 = vld [vmem:[%s6 + $0x70] sm:$0xf]
    %v1519 = vld [vmem:[%s6 + $0x74] sm:$0xf]
    %v1520 = vld [vmem:[%s6 + $0x78] sm:$0xf]
    %v1521 = vld [vmem:[%s6 + $0x7c] sm:$0xf]
    %v1522 = vld [vmem:[%s7] sm:$0x1]
    %v1524 = vlaneseq
    %v1525 = vshrl.u32 %v1524, 7
    %v1526 = vsub.s32 0, %v1525
    %v1527 = vrot.slane %v1522, %v1526
    %v1561 = vunpack.c.l.b16 %v1490
    %v1562 = vunpack.c.l.b16 %v1491
    %v1563 = vunpack.c.l.b16 %v1492
    %v1564 = vunpack.c.l.b16 %v1493
    %v1565 = vunpack.c.l.b16 %v1494
    %v1566 = vunpack.c.l.b16 %v1495
    %v1567 = vunpack.c.l.b16 %v1496
    %v1568 = vunpack.c.l.b16 %v1497
    %v1569 = vunpack.c.l.b16 %v1498
    %v1570 = vunpack.c.l.b16 %v1499
    %v1571 = vunpack.c.l.b16 %v1500
    %v1572 = vunpack.c.l.b16 %v1501
    %v1573 = vunpack.c.l.b16 %v1502
    %v1574 = vunpack.c.l.b16 %v1503
    %v1575 = vunpack.c.l.b16 %v1504
    %v1576 = vunpack.c.l.b16 %v1505
    %v1577 = vunpack.c.l.b16 %v1506
    %v1578 = vunpack.c.l.b16 %v1507
    %v1579 = vunpack.c.l.b16 %v1508
    %v1580 = vunpack.c.l.b16 %v1509
    %v1581 = vunpack.c.l.b16 %v1510
    %v1582 = vunpack.c.l.b16 %v1511
    %v1583 = vunpack.c.l.b16 %v1512
    %v1584 = vunpack.c.l.b16 %v1513
    %v1585 = vunpack.c.l.b16 %v1514
    %v1586 = vunpack.c.l.b16 %v1515
    %v1587 = vunpack.c.l.b16 %v1516
    %v1588 = vunpack.c.l.b16 %v1517
    %v1589 = vunpack.c.l.b16 %v1518
    %v1590 = vunpack.c.l.b16 %v1519
    %v1591 = vunpack.c.l.b16 %v1520
    %v1592 = vunpack.c.l.b16 %v1521
    %v1593 = vpack.c.b16 %v1562, %v1561
    %v1594 = vpack.c.b16 %v1564, %v1563
    %v1595 = vpack.c.b16 %v1566, %v1565
    %v1596 = vpack.c.b16 %v1568, %v1567
    %v1597 = vpack.c.b16 %v1570, %v1569
    %v1598 = vpack.c.b16 %v1572, %v1571
    %v1599 = vpack.c.b16 %v1574, %v1573
    %v1600 = vpack.c.b16 %v1576, %v1575
    %v1601 = vpack.c.b16 %v1578, %v1577
    %v1602 = vpack.c.b16 %v1580, %v1579
    %v1603 = vpack.c.b16 %v1582, %v1581
    %v1604 = vpack.c.b16 %v1584, %v1583
    %v1605 = vpack.c.b16 %v1586, %v1585
    %v1606 = vpack.c.b16 %v1588, %v1587
    %v1607 = vpack.c.b16 %v1590, %v1589
    %v1608 = vpack.c.b16 %v1592, %v1591
    %1625 = vmatprep.subr.bf16.mxu0 0
    %1626 = vmatpush1.bf16.msra.mxu0 %v1593
    %1627 = vmatprep.subr.bf16.mxu0 0
    %1628 = vmatpush1.bf16.msra.mxu0 %v1594
    %1629 = vmatprep.subr.bf16.mxu0 0
    %1630 = vmatpush1.bf16.msra.mxu0 %v1595
    %1631 = vmatprep.subr.bf16.mxu0 0
    %1632 = vmatpush1.bf16.msra.mxu0 %v1596
    %1633 = vmatprep.subr.bf16.mxu0 0
    %1634 = vmatpush1.bf16.msra.mxu0 %v1597
    %1635 = vmatprep.subr.bf16.mxu0 0
    %1636 = vmatpush1.bf16.msra.mxu0 %v1598
    %1637 = vmatprep.subr.bf16.mxu0 0
    %1638 = vmatpush1.bf16.msra.mxu0 %v1599
    %1639 = vmatprep.subr.bf16.mxu0 0
    %1640 = vmatpush1.bf16.msra.mxu0 %v1600
    %1641 = vmatprep.subr.bf16.mxu0 0
    %1642 = vmatpush1.bf16.msra.mxu0 %v1601
    %1643 = vmatprep.subr.bf16.mxu0 0
    %1644 = vmatpush1.bf16.msra.mxu0 %v1602
    %1645 = vmatprep.subr.bf16.mxu0 0
    %1646 = vmatpush1.bf16.msra.mxu0 %v1603
    %1647 = vmatprep.subr.bf16.mxu0 0
    %1648 = vmatpush1.bf16.msra.mxu0 %v1604
    %1649 = vmatprep.subr.bf16.mxu0 0
    %1650 = vmatpush1.bf16.msra.mxu0 %v1605
    %1651 = vmatprep.subr.bf16.mxu0 0
    %1652 = vmatpush1.bf16.msra.mxu0 %v1606
    %1653 = vmatprep.subr.bf16.mxu0 0
    %1654 = vmatpush1.bf16.msra.mxu0 %v1607
    %1655 = vmatprep.subr.bf16.mxu0 0
    %1656 = vmatpush1.bf16.msra.mxu0 %v1608
    %1657 = vmatprep.mubr.bf16.mxu0 %v1489
    %1658 = vmatmul.mubr.bf16.gmra.mrb[0].mxu0 %v1488
    %v1659 = vpop.f32.mrb[0].mxu0
    %v1660 = vadd.f32 %v1527, %v1659
    %v1661 = vpop.f32.mrb[0].mxu0
    %v1662 = vpop.f32.mrb[0].mxu0
    %v1663 = vpop.f32.mrb[0].mxu0
    %1664 = vdwg.mxu0
    %v1665 = vmax.f32 %v1660, 0.0
    %v1666 = vpack.c.bf16 %v1665, %v1665
    %v1667 = vld [vmem:[%s8] sm:$0xff]
    %v1668 = vld [vmem:[%s8 + $0x8] sm:$0xff]
    %v1669 = vld [vmem:[%s8 + $0x10] sm:$0xff]
    %v1670 = vld [vmem:[%s8 + $0x18] sm:$0xff]
    %v1671 = vld [vmem:[%s8 + $0x20] sm:$0xff]
    %v1672 = vld [vmem:[%s8 + $0x28] sm:$0xff]
    %v1673 = vld [vmem:[%s8 + $0x30] sm:$0xff]
    %v1674 = vld [vmem:[%s8 + $0x38] sm:$0xff]
    %v1675 = vld [vmem:[%s8 + $0x40] sm:$0xff]
    %v1676 = vld [vmem:[%s8 + $0x48] sm:$0xff]
    %v1677 = vld [vmem:[%s8 + $0x50] sm:$0xff]
    %v1678 = vld [vmem:[%s8 + $0x58] sm:$0xff]
    %v1679 = vld [vmem:[%s8 + $0x60] sm:$0xff]
    %v1680 = vld [vmem:[%s8 + $0x68] sm:$0xff]
    %v1681 = vld [vmem:[%s8 + $0x70] sm:$0xff]
    %v1682 = vld [vmem:[%s8 + $0x78] sm:$0xff]
    %v1683 = vld [vmem:[%s8 + $0x80] sm:$0xff]
    %v1684 = vld [vmem:[%s8 + $0x88] sm:$0xff]
    %v1685 = vld [vmem:[%s8 + $0x90] sm:$0xff]
    %v1686 = vld [vmem:[%s8 + $0x98] sm:$0xff]
    %v1687 = vld [vmem:[%s8 + $0xa0] sm:$0xff]
    %v1688 = vld [vmem:[%s8 + $0xa8] sm:$0xff]
    %v1689 = vld [vmem:[%s8 + $0xb0] sm:$0xff]
    %v1690 = vld [vmem:[%s8 + $0xb8] sm:$0xff]
    %v1691 = vld [vmem:[%s8 + $0xc0] sm:$0xff]
    %v1692 = vld [vmem:[%s8 + $0xc8] sm:$0xff]
    %v1693 = vld [vmem:[%s8 + $0xd0] sm:$0xff]
    %v1694 = vld [vmem:[%s8 + $0xd8] sm:$0xff]
    %v1695 = vld [vmem:[%s8 + $0xe0] sm:$0xff]
    %v1696 = vld [vmem:[%s8 + $0xe8] sm:$0xff]
    %v1697 = vld [vmem:[%s8 + $0xf0] sm:$0xff]
    %v1698 = vld [vmem:[%s8 + $0xf8] sm:$0xff]
    %v1699 = vld [vmem:[%s8 + $0x100] sm:$0xff]
    %v1700 = vld [vmem:[%s8 + $0x108] sm:$0xff]
    %v1701 = vld [vmem:[%s8 + $0x110] sm:$0xff]
    %v1702 = vld [vmem:[%s8 + $0x118] sm:$0xff]
    %v1703 = vld [vmem:[%s8 + $0x120] sm:$0xff]
    %v1704 = vld [vmem:[%s8 + $0x128] sm:$0xff]
    %v1705 = vld [vmem:[%s8 + $0x130] sm:$0xff]
    %v1706 = vld [vmem:[%s8 + $0x138] sm:$0xff]
    %v1707 = vld [vmem:[%s8 + $0x140] sm:$0xff]
    %v1708 = vld [vmem:[%s8 + $0x148] sm:$0xff]
    %v1709 = vld [vmem:[%s8 + $0x150] sm:$0xff]
    %v1710 = vld [vmem:[%s8 + $0x158] sm:$0xff]
    %v1711 = vld [vmem:[%s8 + $0x160] sm:$0xff]
    %v1712 = vld [vmem:[%s8 + $0x168] sm:$0xff]
    %v1713 = vld [vmem:[%s8 + $0x170] sm:$0xff]
    %v1714 = vld [vmem:[%s8 + $0x178] sm:$0xff]
    %v1715 = vld [vmem:[%s9] sm:$0x3f]
    %v1717 = vlaneseq
    %v1718 = vshrl.u32 %v1717, 7
    %v1719 = vsub.s32 0, %v1718
    %v1720 = vrot.slane %v1715, %v1719
    %v1721 = vlaneseq
    %v1722 = vshrl.u32 %v1721, 7
    %v1723 = vsub.s32 1, %v1722
    %v1724 = vrot.slane %v1715, %v1723
    %v1725 = vlaneseq
    %v1726 = vshrl.u32 %v1725, 7
    %v1727 = vsub.s32 2, %v1726
    %v1728 = vrot.slane %v1715, %v1727
    %v1729 = vlaneseq
    %v1730 = vshrl.u32 %v1729, 7
    %v1731 = vsub.s32 3, %v1730
    %v1732 = vrot.slane %v1715, %v1731
    %v1733 = vlaneseq
    %v1734 = vshrl.u32 %v1733, 7
    %v1735 = vsub.s32 4, %v1734
    %v1736 = vrot.slane %v1715, %v1735
    %v1737 = vlaneseq
    %v1738 = vshrl.u32 %v1737, 7
    %v1739 = vsub.s32 5, %v1738
    %v1740 = vrot.slane %v1715, %v1739
    %v1795 = vunpack.c.l.b16 %v1667
    %v1796 = vunpack.c.h.b16 %v1667
    %v1797 = vunpack.c.l.b16 %v1668
    %v1798 = vunpack.c.h.b16 %v1668
    %v1799 = vunpack.c.l.b16 %v1669
    %v1800 = vunpack.c.h.b16 %v1669
    %v1801 = vunpack.c.l.b16 %v1670
    %v1802 = vunpack.c.h.b16 %v1670
    %v1803 = vunpack.c.l.b16 %v1671
    %v1804 = vunpack.c.h.b16 %v1671
    %v1805 = vunpack.c.l.b16 %v1672
    %v1806 = vunpack.c.h.b16 %v1672
    %v1807 = vunpack.c.l.b16 %v1673
    %v1808 = vunpack.c.h.b16 %v1673
    %v1809 = vunpack.c.l.b16 %v1674
    %v1810 = vunpack.c.h.b16 %v1674
    %v1811 = vunpack.c.l.b16 %v1675
    %v1812 = vunpack.c.h.b16 %v1675
    %v1813 = vunpack.c.l.b16 %v1676
    %v1814 = vunpack.c.h.b16 %v1676
    %v1815 = vunpack.c.l.b16 %v1677
    %v1816 = vunpack.c.h.b16 %v1677
    %v1817 = vunpack.c.l.b16 %v1678
    %v1818 = vunpack.c.h.b16 %v1678
    %v1819 = vunpack.c.l.b16 %v1679
    %v1820 = vunpack.c.h.b16 %v1679
    %v1821 = vunpack.c.l.b16 %v1680
    %v1822 = vunpack.c.h.b16 %v1680
    %v1823 = vunpack.c.l.b16 %v1681
    %v1824 = vunpack.c.h.b16 %v1681
    %v1825 = vunpack.c.l.b16 %v1682
    %v1826 = vunpack.c.h.b16 %v1682
    %v1827 = vunpack.c.l.b16 %v1683
    %v1828 = vunpack.c.h.b16 %v1683
    %v1829 = vunpack.c.l.b16 %v1684
    %v1830 = vunpack.c.h.b16 %v1684
    %v1831 = vunpack.c.l.b16 %v1685
    %v1832 = vunpack.c.h.b16 %v1685
    %v1833 = vunpack.c.l.b16 %v1686
    %v1834 = vunpack.c.h.b16 %v1686
    %v1835 = vunpack.c.l.b16 %v1687
    %v1836 = vunpack.c.h.b16 %v1687
    %v1837 = vunpack.c.l.b16 %v1688
    %v1838 = vunpack.c.h.b16 %v1688
    %v1839 = vunpack.c.l.b16 %v1689
    %v1840 = vunpack.c.h.b16 %v1689
    %v1841 = vunpack.c.l.b16 %v1690
    %v1842 = vunpack.c.h.b16 %v1690
    %v1843 = vunpack.c.l.b16 %v1691
    %v1844 = vunpack.c.h.b16 %v1691
    %v1845 = vunpack.c.l.b16 %v1692
    %v1846 = vunpack.c.h.b16 %v1692
    %v1847 = vunpack.c.l.b16 %v1693
    %v1848 = vunpack.c.h.b16 %v1693
    %v1849 = vunpack.c.l.b16 %v1694
    %v1850 = vunpack.c.h.b16 %v1694
    %v1851 = vunpack.c.l.b16 %v1695
    %v1852 = vunpack.c.h.b16 %v1695
    %v1853 = vunpack.c.l.b16 %v1696
    %v1854 = vunpack.c.h.b16 %v1696
    %v1855 = vunpack.c.l.b16 %v1697
    %v1856 = vunpack.c.h.b16 %v1697
    %v1857 = vunpack.c.l.b16 %v1698
    %v1858 = vunpack.c.h.b16 %v1698
    %v1859 = vunpack.c.l.b16 %v1699
    %v1860 = vunpack.c.h.b16 %v1699
    %v1861 = vunpack.c.l.b16 %v1700
    %v1862 = vunpack.c.h.b16 %v1700
    %v1863 = vunpack.c.l.b16 %v1701
    %v1864 = vunpack.c.h.b16 %v1701
    %v1865 = vunpack.c.l.b16 %v1702
    %v1866 = vunpack.c.h.b16 %v1702
    %v1867 = vunpack.c.l.b16 %v1703
    %v1868 = vunpack.c.h.b16 %v1703
    %v1869 = vunpack.c.l.b16 %v1704
    %v1870 = vunpack.c.h.b16 %v1704
    %v1871 = vunpack.c.l.b16 %v1705
    %v1872 = vunpack.c.h.b16 %v1705
    %v1873 = vunpack.c.l.b16 %v1706
    %v1874 = vunpack.c.h.b16 %v1706
    %v1875 = vunpack.c.l.b16 %v1707
    %v1876 = vunpack.c.h.b16 %v1707
    %v1877 = vunpack.c.l.b16 %v1708
    %v1878 = vunpack.c.h.b16 %v1708
    %v1879 = vunpack.c.l.b16 %v1709
    %v1880 = vunpack.c.h.b16 %v1709
    %v1881 = vunpack.c.l.b16 %v1710
    %v1882 = vunpack.c.h.b16 %v1710
    %v1883 = vunpack.c.l.b16 %v1711
    %v1884 = vunpack.c.h.b16 %v1711
    %v1885 = vunpack.c.l.b16 %v1712
    %v1886 = vunpack.c.h.b16 %v1712
    %v1887 = vunpack.c.l.b16 %v1713
    %v1888 = vunpack.c.h.b16 %v1713
    %v1889 = vunpack.c.l.b16 %v1714
    %v1890 = vunpack.c.h.b16 %v1714
    %v1891 = vpack.c.b16 %v1801, %v1795
    %v1892 = vpack.c.b16 %v1802, %v1796
    %v1893 = vpack.c.b16 %v1803, %v1797
    %v1894 = vpack.c.b16 %v1804, %v1798
    %v1895 = vpack.c.b16 %v1805, %v1799
    %v1896 = vpack.c.b16 %v1806, %v1800
    %v1897 = vpack.c.b16 %v1813, %v1807
    %v1898 = vpack.c.b16 %v1814, %v1808
    %v1899 = vpack.c.b16 %v1815, %v1809
    %v1900 = vpack.c.b16 %v1816, %v1810
    %v1901 = vpack.c.b16 %v1817, %v1811
    %v1902 = vpack.c.b16 %v1818, %v1812
    %v1903 = vpack.c.b16 %v1825, %v1819
    %v1904 = vpack.c.b16 %v1826, %v1820
    %v1905 = vpack.c.b16 %v1827, %v1821
    %v1906 = vpack.c.b16 %v1828, %v1822
    %v1907 = vpack.c.b16 %v1829, %v1823
    %v1908 = vpack.c.b16 %v1830, %v1824
    %v1909 = vpack.c.b16 %v1837, %v1831
    %v1910 = vpack.c.b16 %v1838, %v1832
    %v1911 = vpack.c.b16 %v1839, %v1833
    %v1912 = vpack.c.b16 %v1840, %v1834
    %v1913 = vpack.c.b16 %v1841, %v1835
    %v1914 = vpack.c.b16 %v1842, %v1836
    %v1915 = vpack.c.b16 %v1849, %v1843
    %v1916 = vpack.c.b16 %v1850, %v1844
    %v1917 = vpack.c.b16 %v1851, %v1845
    %v1918 = vpack.c.b16 %v1852, %v1846
    %v1919 = vpack.c.b16 %v1853, %v1847
    %v1920 = vpack.c.b16 %v1854, %v1848
    %v1921 = vpack.c.b16 %v1861, %v1855
    %v1922 = vpack.c.b16 %v1862, %v1856
    %v1923 = vpack.c.b16 %v1863, %v1857
    %v1924 = vpack.c.b16 %v1864, %v1858
    %v1925 = vpack.c.b16 %v1865, %v1859
    %v1926 = vpack.c.b16 %v1866, %v1860
    %v1927 = vpack.c.b16 %v1873, %v1867
    %v1928 = vpack.c.b16 %v1874, %v1868
    %v1929 = vpack.c.b16 %v1875, %v1869
    %v1930 = vpack.c.b16 %v1876, %v1870
    %v1931 = vpack.c.b16 %v1877, %v1871
    %v1932 = vpack.c.b16 %v1878, %v1872
    %v1933 = vpack.c.b16 %v1885, %v1879
    %v1934 = vpack.c.b16 %v1886, %v1880
    %v1935 = vpack.c.b16 %v1887, %v1881
    %v1936 = vpack.c.b16 %v1888, %v1882
    %v1937 = vpack.c.b16 %v1889, %v1883
    %v1938 = vpack.c.b16 %v1890, %v1884
    %1987 = vmatprep.subr.bf16.mxu0 %v1892
    %1988 = vmatpush1.bf16.msra.mxu0 %v1891
    %1989 = vmatprep.subr.bf16.mxu0 %v1898
    %1990 = vmatpush1.bf16.msra.mxu0 %v1897
    %1991 = vmatprep.subr.bf16.mxu0 %v1904
    %1992 = vmatpush1.bf16.msra.mxu0 %v1903
    %1993 = vmatprep.subr.bf16.mxu0 %v1910
    %1994 = vmatpush1.bf16.msra.mxu0 %v1909
    %1995 = vmatprep.subr.bf16.mxu0 %v1916
    %1996 = vmatpush1.bf16.msra.mxu0 %v1915
    %1997 = vmatprep.subr.bf16.mxu0 %v1922
    %1998 = vmatpush1.bf16.msra.mxu0 %v1921
    %1999 = vmatprep.subr.bf16.mxu0 %v1928
    %2000 = vmatpush1.bf16.msra.mxu0 %v1927
    %2001 = vmatprep.subr.bf16.mxu0 %v1934
    %2002 = vmatpush1.bf16.msra.mxu0 %v1933
    %2003 = vmatprep.subr.bf16.mxu0 0
    %2004 = vmatpush1.bf16.msra.mxu0 0
    %2005 = vmatprep.subr.bf16.mxu0 0
    %2006 = vmatpush1.bf16.msra.mxu0 0
    %2007 = vmatprep.subr.bf16.mxu0 0
    %2008 = vmatpush1.bf16.msra.mxu0 0
    %2009 = vmatprep.subr.bf16.mxu0 0
    %2010 = vmatpush1.bf16.msra.mxu0 0
    %2011 = vmatprep.subr.bf16.mxu0 0
    %2012 = vmatpush1.bf16.msra.mxu0 0
    %2013 = vmatprep.subr.bf16.mxu0 0
    %2014 = vmatpush1.bf16.msra.mxu0 0
    %2015 = vmatprep.subr.bf16.mxu0 0
    %2016 = vmatpush1.bf16.msra.mxu0 0
    %2017 = vmatprep.subr.bf16.mxu0 0
    %2018 = vmatpush1.bf16.msra.mxu0 0
    %2019 = vmatprep.mubr.bf16.mxu0 0
    %2020 = vmatmul.mubr.bf16.gmra.mrb[0].mxu0 %v1666
    %v2021 = vpop.f32.mrb[0].mxu0
    %v2022 = vadd.f32 %v1720, %v2021
    %v2023 = vpop.f32.mrb[0].mxu0
    %v2024 = vadd.f32 %v1724, %v2023
    %v2025 = vpop.f32.mrb[0].mxu0
    %v2026 = vpop.f32.mrb[0].mxu0
    %2027 = vdwg.mxu0
    %2028 = vmatprep.subr.bf16.mxu0 %v1894
    %2029 = vmatpush1.bf16.msra.mxu0 %v1893
    %2030 = vmatprep.subr.bf16.mxu0 %v1900
    %2031 = vmatpush1.bf16.msra.mxu0 %v1899
    %2032 = vmatprep.subr.bf16.mxu0 %v1906
    %2033 = vmatpush1.bf16.msra.mxu0 %v1905
    %2034 = vmatprep.subr.bf16.mxu0 %v1912
    %2035 = vmatpush1.bf16.msra.mxu0 %v1911
    %2036 = vmatprep.subr.bf16.mxu0 %v1918
    %2037 = vmatpush1.bf16.msra.mxu0 %v1917
    %2038 = vmatprep.subr.bf16.mxu0 %v1924
    %2039 = vmatpush1.bf16.msra.mxu0 %v1923
    %2040 = vmatprep.subr.bf16.mxu0 %v1930
    %2041 = vmatpush1.bf16.msra.mxu0 %v1929
    %2042 = vmatprep.subr.bf16.mxu0 %v1936
    %2043 = vmatpush1.bf16.msra.mxu0 %v1935
    %2044 = vmatprep.subr.bf16.mxu0 0
    %2045 = vmatpush1.bf16.msra.mxu0 0
    %2046 = vmatprep.subr.bf16.mxu0 0
    %2047 = vmatpush1.bf16.msra.mxu0 0
    %2048 = vmatprep.subr.bf16.mxu0 0
    %2049 = vmatpush1.bf16.msra.mxu0 0
    %2050 = vmatprep.subr.bf16.mxu0 0
    %2051 = vmatpush1.bf16.msra.mxu0 0
    %2052 = vmatprep.subr.bf16.mxu0 0
    %2053 = vmatpush1.bf16.msra.mxu0 0
    %2054 = vmatprep.subr.bf16.mxu0 0
    %2055 = vmatpush1.bf16.msra.mxu0 0
    %2056 = vmatprep.subr.bf16.mxu0 0
    %2057 = vmatpush1.bf16.msra.mxu0 0
    %2058 = vmatprep.subr.bf16.mxu0 0
    %2059 = vmatpush1.bf16.msra.mxu0 0
    %2060 = vmatprep.mubr.bf16.mxu0 0
    %2061 = vmatmul.mubr.bf16.gmra.mrb[0].mxu0 %v1666
    %v2062 = vpop.f32.mrb[0].mxu0
    %v2063 = vadd.f32 %v1728, %v2062
    %v2064 = vpop.f32.mrb[0].mxu0
    %v2065 = vadd.f32 %v1732, %v2064
    %v2066 = vpop.f32.mrb[0].mxu0
    %v2067 = vpop.f32.mrb[0].mxu0
    %2068 = vdwg.mxu0
    %2069 = vmatprep.subr.bf16.mxu0 %v1896
    %2070 = vmatpush1.bf16.msra.mxu0 %v1895
    %2071 = vmatprep.subr.bf16.mxu0 %v1902
    %2072 = vmatpush1.bf16.msra.mxu0 %v1901
    %2073 = vmatprep.subr.bf16.mxu0 %v1908
    %2074 = vmatpush1.bf16.msra.mxu0 %v1907
    %2075 = vmatprep.subr.bf16.mxu0 %v1914
    %2076 = vmatpush1.bf16.msra.mxu0 %v1913
    %2077 = vmatprep.subr.bf16.mxu0 %v1920
    %2078 = vmatpush1.bf16.msra.mxu0 %v1919
    %2079 = vmatprep.subr.bf16.mxu0 %v1926
    %2080 = vmatpush1.bf16.msra.mxu0 %v1925
    %2081 = vmatprep.subr.bf16.mxu0 %v1932
    %2082 = vmatpush1.bf16.msra.mxu0 %v1931
    %2083 = vmatprep.subr.bf16.mxu0 %v1938
    %2084 = vmatpush1.bf16.msra.mxu0 %v1937
    %2085 = vmatprep.subr.bf16.mxu0 0
    %2086 = vmatpush1.bf16.msra.mxu0 0
    %2087 = vmatprep.subr.bf16.mxu0 0
    %2088 = vmatpush1.bf16.msra.mxu0 0
    %2089 = vmatprep.subr.bf16.mxu0 0
    %2090 = vmatpush1.bf16.msra.mxu0 0
    %2091 = vmatprep.subr.bf16.mxu0 0
    %2092 = vmatpush1.bf16.msra.mxu0 0
    %2093 = vmatprep.subr.bf16.mxu0 0
    %2094 = vmatpush1.bf16.msra.mxu0 0
    %2095 = vmatprep.subr.bf16.mxu0 0
    %2096 = vmatpush1.bf16.msra.mxu0 0
    %2097 = vmatprep.subr.bf16.mxu0 0
    %2098 = vmatpush1.bf16.msra.mxu0 0
    %2099 = vmatprep.subr.bf16.mxu0 0
    %2100 = vmatpush1.bf16.msra.mxu0 0
    %2101 = vmatprep.mubr.bf16.mxu0 0
    %2102 = vmatmul.mubr.bf16.gmra.mrb[0].mxu0 %v1666
    %v2103 = vpop.f32.mrb[0].mxu0
    %v2104 = vadd.f32 %v1736, %v2103
    %v2105 = vpop.f32.mrb[0].mxu0
    %v2106 = vadd.f32 %v1740, %v2105
    %v2107 = vpop.f32.mrb[0].mxu0
    %v2108 = vpop.f32.mrb[0].mxu0
    %2109 = vdwg.mxu0
    %2110 = vst [vmem:[#allocation3] sm:$0xff] %v2022
    %2111 = vst [vmem:[#allocation3 + $0x8] sm:$0xff] %v2024
    %2112 = vst [vmem:[#allocation3 + $0x10] sm:$0xff] %v2063
    %2113 = vst [vmem:[#allocation3 + $0x18] sm:$0xff] %v2065
    %2114 = vst [vmem:[#allocation3 + $0x20] sm:$0xff] %v2104
    %2115 = vst [vmem:[#allocation3 + $0x28] sm:$0xff] %v2106
    // Predicated region
    $region42: #{prompt_generator_mlp.1} parent=1 // pred_check
      _
    $region43: #{prompt_generator_mlp.1} parent=1 // pred_check_branch
      %2117 = sbr.rel (0) target = $region45
    $region44: #{prompt_generator_mlp.1} parent=1 // pred_region
      %s2119 = ssub.s32 768, 768
      %2120 = vsyncadd [#allocation4], %s2119
      %s2122 = sshll.u32 [#allocation3], 4
      %s2123 = int_to_ptr.vmem [resolvable:$true] %s2122
      %2125 = dma.vmem_to_hbm [thread:$0]  %s2123, 768, %s10, [#allocation4]
    $region45: #{prompt_generator_mlp.1} parent=1 // pred_fallthru
      _
    // Predicated region
    $region46: #{prompt_generator_mlp.1} parent=1 // pred_check
      _
    $region47: #{prompt_generator_mlp.1} parent=1 // pred_check_branch
      %2127 = sbr.rel (0) target = $region49
    $region48: #{prompt_generator_mlp.1} parent=1 // pred_region
      %2128 = dma.done [#allocation4], 768
    $region49: #{prompt_generator_mlp.1} parent=1 // pred_fallthru
      _
    %2129 = vsyncpa [#allocation4], 1

</llo_original>
